<compile_context>
chip_gen: v7x
topology: tpu7x:2x2x1
jax: 0.10.0
libtpu: 0.0.40
codegen_flags: <defaults>
</compile_context>

<pallas_src>
import jax
import jax.numpy as jnp
import numpy as np
from jax import lax
from jax.experimental import pallas as pl
from jax.experimental.pallas import tpu as pltpu

THRESH = 0.3
OUT_THRESH = 1.0e6   # 'mem_sum' loss -> output_thresh = 1e6 (and th_reset = 1e6)

LANE = 128
SUBLANE = 8


def _rup(n, m):
    return ((n + m - 1) // m) * m


def snn_kernel(x_ref, w0_ref, w1_ref, wo_ref, a1_ref, a2_ref, ao_ref,
               omem_out, ospk_out, prev_sc, mem1_sc, mem2_sc, omem_sc):
    """One (batch_block, time_chunk) grid step of the SNN recurrence.

    x_ref      : (Tc, Bb, D)   input chunk (true feature width, f32)
    w*_ref     : (in, out)     bf16 MXU operands (zero-padded to 128 lanes)
    a*_ref     : (1, N)        sigmoid(tau), f32, padded
    *_out      : (Tc, Bb, Op)  per-step output membrane / spikes for this chunk
    prev_sc    : (Tc, Bb, N1)  per-chunk layer-1 currents (VMEM scratch)
    mem*_sc    : (Bb, N)       recurrent state carried across time chunks
    """
    Tc, Bb, N1 = prev_sc.shape
    N2 = w1_ref.shape[1]
    O = wo_ref.shape[1]
    D = x_ref.shape[-1]
    dot_dt = w1_ref.dtype          # bf16 MXU operand dtype

    # Fresh recurrent state at the first time chunk of each batch block.
    @pl.when(pl.program_id(1) == 0)
    def _():
        mem1_sc[...] = jnp.zeros_like(mem1_sc)
        mem2_sc[...] = jnp.zeros_like(mem2_sc)
        omem_sc[...] = jnp.zeros_like(omem_sc)

    # Hoisted, non-recurrent layer-1 matmul over the whole time chunk:
    # (Tc*Bb, D) @ (D, N1) -> many MXU rows at once instead of Tc tiny matmuls.
    x2d = x_ref[...].reshape(Tc * Bb, D).astype(dot_dt)
    prev_sc[...] = jnp.dot(
        x2d, w0_ref[...], preferred_element_type=jnp.float32
    ).reshape(Tc, Bb, N1)

    # Hoist alpha broadcasts out of the time loop (JAX does not CSE them).
    a1 = jnp.broadcast_to(a1_ref[...], (Bb, N1))
    a2 = jnp.broadcast_to(a2_ref[...], (Bb, N2))
    ao = jnp.broadcast_to(ao_ref[...], (Bb, O))

    def step(t, carry):
        # NOTE: the reset `mem = where(m < thresh, m, 0)` guarantees mem == 0
        # whenever the neuron spiked, so the reference's `* (1 - spike)`
        # refractory factor is algebraically redundant and omitted; spikes are
        # therefore not carried.
        mem1, mem2, omem = carry
        prev = prev_sc[t]                                     # (Bb, N1) f32

        # --- hidden layer 1 (h_layers[0] = Identity) ---
        m = mem1 * a1 + prev
        s1 = (m > THRESH).astype(dot_dt)                      # spike in MXU dtype
        mem1 = jnp.where(m < THRESH, m, 0.0)

        # --- hidden layer 2 (f1_f2) ---
        cur = jnp.dot(s1, w1_ref[...], preferred_element_type=jnp.float32)
        m = mem2 * a2 + cur
        s2 = (m > THRESH).astype(dot_dt)
        mem2 = jnp.where(m < THRESH, m, 0.0)

        # --- output layer (f2_o), output_thresh = 1e6 ---
        cur = jnp.dot(s2, wo_ref[...], preferred_element_type=jnp.float32)
        m = omem * ao + cur
        osp = (m > OUT_THRESH).astype(jnp.float32)
        omem = jnp.where(m < OUT_THRESH, m, 0.0)

        # Lane-dense (Bb, 128) stores into the pipelined output chunk.
        omem_out[t] = omem
        ospk_out[t] = osp
        return (mem1, mem2, omem)

    init = (mem1_sc[...], mem2_sc[...], omem_sc[...])
    unroll = Tc if Tc <= 8 else 4           # partial unroll for long chunks
    mem1, mem2, omem = lax.fori_loop(0, Tc, step, init, unroll=unroll)

    # Carry recurrent state to the next time chunk of this batch block.
    mem1_sc[...] = mem1
    mem2_sc[...] = mem2
    omem_sc[...] = omem


def snn_forward(x, w0, w1, wo, tau1, tau2, tau_o, *, time_chunk=8):
    """x: (T, B, D_in) time-major; w*: (in, out) pre-transposed; tau*: (N,).

    Returns (o_mems, o_spikes), each (T, B, num_output), f32.
    Matmuls use bf16 operands with f32 accumulation; elementwise math is f32.
    """
    T, B, D_in = x.shape
    N1, N2, O = w0.shape[1], w1.shape[1], wo.shape[1]

    # --- batch blocking: >=2 blocks when possible so the "parallel" grid axis
    # can use v7x's second TensorCore; target ~128 MXU rows per block at
    # realistic batch sizes. ---
    Bp = _rup(B, SUBLANE)
    if Bp >= 256:
        Bb = 128
    elif Bp >= 16:
        Bb = _rup(Bp // 2, SUBLANE)
    else:
        Bb = Bp
    Gb = -(-Bp // Bb)
    Bp = Gb * Bb

    # --- time chunking (pipelined "arbitrary" grid axis); pad T if needed. ---
    Tc = min(time_chunk, T)
    Tp = _rup(T, Tc)
    Gt = Tp // Tc

    N1p, N2p, Op = _rup(N1, LANE), _rup(N2, LANE), _rup(O, LANE)

    f32, bf16 = jnp.float32, jnp.bfloat16

    # Input keeps its true feature width in HBM (no 8x lane padding of the x
    # stream); padded batch rows / time steps are all-zero and never spike.
    xp = jnp.pad(x.astype(f32), ((0, Tp - T), (0, Bp - B), (0, 0)))

    # bf16 MXU operands; zero padding is exactly neutral (padded lanes never
    # spike and padded weights contribute 0).
    w0p = jnp.pad(w0.astype(f32), ((0, 0), (0, N1p - N1))).astype(bf16)
    w1p = jnp.pad(w1.astype(f32), ((0, N1p - N1), (0, N2p - N2))).astype(bf16)
    wop = jnp.pad(wo.astype(f32), ((0, N2p - N2), (0, Op - O))).astype(bf16)

    # glue: alpha = sigmoid(tau), f32, broadcast-ready (1, N)
    a1 = jnp.pad(jax.nn.sigmoid(tau1).astype(f32), (0, N1p - N1)).reshape(1, N1p)
    a2 = jnp.pad(jax.nn.sigmoid(tau2).astype(f32), (0, N2p - N2)).reshape(1, N2p)
    ao = jnp.pad(jax.nn.sigmoid(tau_o).astype(f32), (0, Op - O)).reshape(1, Op)

    o_mem_p, o_spk_p = pl.pallas_call(
        snn_kernel,
        out_shape=(
            jax.ShapeDtypeStruct((Tp, Bp, Op), f32),
            jax.ShapeDtypeStruct((Tp, Bp, Op), f32),
        ),
        grid=(Gb, Gt),
        in_specs=[
            pl.BlockSpec((Tc, Bb, D_in), lambda b, t: (t, b, 0)),   # x chunk
            pl.BlockSpec((D_in, N1p), lambda b, t: (0, 0)),         # W0
            pl.BlockSpec((N1p, N2p), lambda b, t: (0, 0)),          # W1
            pl.BlockSpec((N2p, Op), lambda b, t: (0, 0)),           # Wo
            pl.BlockSpec((1, N1p), lambda b, t: (0, 0)),            # alpha1
            pl.BlockSpec((1, N2p), lambda b, t: (0, 0)),            # alpha2
            pl.BlockSpec((1, Op), lambda b, t: (0, 0)),             # alpha_o
        ],
        out_specs=(
            pl.BlockSpec((Tc, Bb, Op), lambda b, t: (t, b, 0)),
            pl.BlockSpec((Tc, Bb, Op), lambda b, t: (t, b, 0)),
        ),
        scratch_shapes=[
            pltpu.VMEM((Tc, Bb, N1p), f32),   # per-chunk layer-1 currents
            pltpu.VMEM((Bb, N1p), f32),       # mem1 carried across time chunks
            pltpu.VMEM((Bb, N2p), f32),       # mem2
            pltpu.VMEM((Bb, Op), f32),        # o_mem
        ],
        compiler_params=pltpu.CompilerParams(
            dimension_semantics=("parallel", "arbitrary"),
            vmem_limit_bytes=64 * 1024 * 1024,
        ),
    )(xp, w0p, w1p, wop, a1, a2, ao)

    # TODO(synk): at very large T*B the 128-lane-padded output writeback becomes
    # the dominant HBM stream; pack/slice to the true num_output before writeback
    # (accepting masked stores) if that ever dominates.
    return o_mem_p[:T, :B, :O], o_spk_p[:T, :B, :O]


def snn_forward_ref(x, w0, w1, wo, tau1, tau2, tau_o, dot_dtype=jnp.float32):
    """Pure-JAX reference mirroring the PyTorch forward() literally
    (including the (1 - spike) refractory term); matmul operand dtype is a
    parameter so it can match the kernel's bf16 MXU precision."""
    T, B, _ = x.shape
    f32 = jnp.float32
    a1, a2, ao = (jax.nn.sigmoid(t).astype(f32) for t in (tau1, tau2, tau_o))
    w0d, w1d, wod = (w.astype(dot_dtype) for w in (w0, w1, wo))
    mem1 = jnp.zeros((B, w0.shape[1]), f32); spk1 = jnp.zeros_like(mem1)
    mem2 = jnp.zeros((B, w1.shape[1]), f32); spk2 = jnp.zeros_like(mem2)
    omem = jnp.zeros((B, wo.shape[1]), f32); ospk = jnp.zeros_like(omem)
    o_mems, o_spks = [], []
    for t in range(T):
        prev = jnp.dot(x[t].astype(dot_dtype), w0d, preferred_element_type=f32)
        m = mem1 * a1 * (1.0 - spk1) + prev
        spk1 = (m - THRESH > 0).astype(f32); mem1 = m * (m < THRESH)
        cur = jnp.dot(spk1.astype(dot_dtype), w1d, preferred_element_type=f32)
        m = mem2 * a2 * (1.0 - spk2) + cur
        spk2 = (m - THRESH > 0).astype(f32); mem2 = m * (m < THRESH)
        cur = jnp.dot(spk2.astype(dot_dtype), wod, preferred_element_type=f32)
        m = omem * ao * (1.0 - ospk) + cur
        ospk = (m - OUT_THRESH > 0).astype(f32); omem = m * (m < OUT_THRESH)
        o_mems.append(omem); o_spks.append(ospk)
    return jnp.stack(o_mems), jnp.stack(o_spks)


if __name__ == "__main__":
    # small shapes consistent with the module:
    #   batch=8, win=8, num_input=16, num_neurons_list=[32, 32], num_output=16
    B, T, D_in, N1, N2, O = 8, 8, 16, 32, 32, 16

    key = jax.random.PRNGKey(0)
    kx, k0, k1, k2, kt1, kt2, kto = jax.random.split(key, 7)

    # deterministic synthetic parameters (PyTorch-Linear-like uniform init, bias=False)
    x = (jax.random.uniform(kx, (T, B, D_in)) > 0.7).astype(jnp.float32)  # spike input
    w0 = jax.random.uniform(k0, (D_in, N1), minval=-1.0, maxval=1.0) / np.sqrt(D_in)
    w1 = jax.random.uniform(k1, (N1, N2), minval=-1.0, maxval=1.0) / np.sqrt(N1)
    wo = jax.random.uniform(k2, (N2, O), minval=-1.0, maxval=1.0) / np.sqrt(N2)

    # tau_m 'normal' init: mean = logit(exp(-delta_t / mean_tau)), std = 1
    mean_tau, time_ms = 20.0, 50.0
    delta_t = time_ms / float(T)
    p = np.exp(-delta_t / mean_tau)
    mean = float(np.log(p / (1.0 - p)))
    tau1 = mean + jax.random.normal(kt1, (N1,))
    tau2 = mean + jax.random.normal(kt2, (N2,))
    tau_o = jax.random.normal(kto, (O,))      # tau_m_o ~ Normal(0, 1) per set_tau_m

    # time_chunk=4 -> 2 time chunks, exercising the cross-chunk state carry.
    o_mems, o_spks = snn_forward(x, w0, w1, wo, tau1, tau2, tau_o, time_chunk=4)
    jax.block_until_ready((o_mems, o_spks))

    # Reference with the same bf16 matmul-operand precision as the kernel
    # (membrane math f32 in both); spikes compared exactly.
    r_mems, r_spks = snn_forward_ref(x, w0, w1, wo, tau1, tau2, tau_o,
                                     dot_dtype=jnp.bfloat16)
    np.testing.assert_allclose(np.asarray(o_mems), np.asarray(r_mems),
                               rtol=1e-4, atol=1e-4)
    np.testing.assert_allclose(np.asarray(o_spks), np.asarray(r_spks),
                               rtol=0, atol=0)

    print("KERNEL_OK")
</pallas_src>

<mosaic_0001>
module attributes {stable_mosaic.version = 11 : i64} {
  func.func @snn_kernel(%arg0: i32, %arg1: i32, %arg2: memref<4x8x16xf32, #tpu.memory_space<vmem>>, %arg3: memref<16x128xbf16, #tpu.memory_space<vmem>>, %arg4: memref<128x128xbf16, #tpu.memory_space<vmem>>, %arg5: memref<128x128xbf16, #tpu.memory_space<vmem>>, %arg6: memref<1x128xf32, #tpu.memory_space<vmem>>, %arg7: memref<1x128xf32, #tpu.memory_space<vmem>>, %arg8: memref<1x128xf32, #tpu.memory_space<vmem>>, %arg9: memref<4x8x128xf32, #tpu.memory_space<vmem>>, %arg10: memref<4x8x128xf32, #tpu.memory_space<vmem>>, %arg11: memref<4x8x128xf32, #tpu.memory_space<vmem>>, %arg12: memref<8x128xf32, #tpu.memory_space<vmem>>, %arg13: memref<8x128xf32, #tpu.memory_space<vmem>>, %arg14: memref<8x128xf32, #tpu.memory_space<vmem>>) attributes {dimension_semantics = [#tpu.dimension_semantics<parallel>, #tpu.dimension_semantics<arbitrary>], iteration_bounds = array<i64: 1, 2>, scalar_prefetch = 0 : i64, scratch_operands = 4 : i64, tpu.core_type = #tpu.core_type<tc>, window_params = [{transform_indices = @transform_0, window_bounds = array<i64: 4, 8, 16>}, {pipeline_mode = #tpu.pipeline_mode<synchronous>, transform_indices = @transform_1, window_bounds = array<i64: 16, 128>}, {pipeline_mode = #tpu.pipeline_mode<synchronous>, transform_indices = @transform_2, window_bounds = array<i64: 128, 128>}, {pipeline_mode = #tpu.pipeline_mode<synchronous>, transform_indices = @transform_3, window_bounds = array<i64: 128, 128>}, {pipeline_mode = #tpu.pipeline_mode<synchronous>, transform_indices = @transform_4, window_bounds = array<i64: 1, 128>}, {pipeline_mode = #tpu.pipeline_mode<synchronous>, transform_indices = @transform_5, window_bounds = array<i64: 1, 128>}, {pipeline_mode = #tpu.pipeline_mode<synchronous>, transform_indices = @transform_6, window_bounds = array<i64: 1, 128>}, {transform_indices = @transform_7, window_bounds = array<i64: 4, 8, 128>}, {transform_indices = @transform_8, window_bounds = array<i64: 4, 8, 128>}]} {
    %c0_i32 = arith.constant 0 : i32
    %0 = arith.cmpi eq, %arg1, %c0_i32 : i32
    %1 = arith.extui %0 : i1 to i32
    %c0_i32_0 = arith.constant 0 : i32
    %2 = arith.cmpi ne, %1, %c0_i32_0 : i32
    scf.if %2 {
      %cst_111 = arith.constant 0.000000e+00 : f32
      %213 = vector.broadcast %cst_111 : f32 to vector<8x128xf32>
      %c0_112 = arith.constant 0 : index
      %c0_113 = arith.constant 0 : index
      %214 = vector.load %arg12[%c0_112, %c0_113] : memref<8x128xf32, #tpu.memory_space<vmem>>, vector<8x128xf32>
      tpu.vector_store %arg12[%c0_112, %c0_113], %213 {strides = array<i32>} : memref<8x128xf32, #tpu.memory_space<vmem>>, vector<8x128xf32>,
      %cst_114 = arith.constant 0.000000e+00 : f32
      %215 = vector.broadcast %cst_114 : f32 to vector<8x128xf32>
      %c0_115 = arith.constant 0 : index
      %c0_116 = arith.constant 0 : index
      %216 = vector.load %arg13[%c0_115, %c0_116] : memref<8x128xf32, #tpu.memory_space<vmem>>, vector<8x128xf32>
      tpu.vector_store %arg13[%c0_115, %c0_116], %215 {strides = array<i32>} : memref<8x128xf32, #tpu.memory_space<vmem>>, vector<8x128xf32>,
      %cst_117 = arith.constant 0.000000e+00 : f32
      %217 = vector.broadcast %cst_117 : f32 to vector<8x128xf32>
      %c0_118 = arith.constant 0 : index
      %c0_119 = arith.constant 0 : index
      %218 = vector.load %arg14[%c0_118, %c0_119] : memref<8x128xf32, #tpu.memory_space<vmem>>, vector<8x128xf32>
      tpu.vector_store %arg14[%c0_118, %c0_119], %217 {strides = array<i32>} : memref<8x128xf32, #tpu.memory_space<vmem>>, vector<8x128xf32>,
    } else {
    }
    %c0 = arith.constant 0 : index
    %c0_1 = arith.constant 0 : index
    %c0_2 = arith.constant 0 : index
    %3 = vector.load %arg2[%c0, %c0_1, %c0_2] : memref<4x8x16xf32, #tpu.memory_space<vmem>>, vector<4x8x16xf32>
    %4 = vector.shape_cast %3 : vector<4x8x16xf32> to vector<32x16xf32>
    %5 = arith.truncf %4 : vector<32x16xf32> to vector<32x16xbf16>
    %c0_3 = arith.constant 0 : index
    %c0_4 = arith.constant 0 : index
    %6 = vector.load %arg3[%c0_3, %c0_4] : memref<16x128xbf16, #tpu.memory_space<vmem>>, vector<16x128xbf16>
    %cst = arith.constant dense<0.000000e+00> : vector<32x128xf32>
    %7 = tpu.matmul %5, %6, %cst {dimension_numbers = #tpu.dot_dimension_numbers<[1], [0], [0], [1], [0, 0, 1, 1], [], []>} : vector<32x16xbf16>, vector<16x128xbf16>, vector<32x128xf32> -> vector<32x128xf32>
    %8 = vector.shape_cast %7 : vector<32x128xf32> to vector<4x8x128xf32>
    %c0_5 = arith.constant 0 : index
    %c0_6 = arith.constant 0 : index
    %c0_7 = arith.constant 0 : index
    %9 = vector.load %arg11[%c0_5, %c0_6, %c0_7] : memref<4x8x128xf32, #tpu.memory_space<vmem>>, vector<4x8x128xf32>
    tpu.vector_store %arg11[%c0_5, %c0_6, %c0_7], %8 {strides = array<i32>} : memref<4x8x128xf32, #tpu.memory_space<vmem>>, vector<4x8x128xf32>,
    %c0_8 = arith.constant 0 : index
    %c0_9 = arith.constant 0 : index
    %10 = vector.load %arg6[%c0_8, %c0_9] : memref<1x128xf32, #tpu.memory_space<vmem>>, vector<1x128xf32>
    %11 = vector.shape_cast %10 : vector<1x128xf32> to vector<1x128xf32>
    %12 = vector.broadcast %11 : vector<1x128xf32> to vector<8x128xf32>
    %c0_10 = arith.constant 0 : index
    %c0_11 = arith.constant 0 : index
    %13 = vector.load %arg7[%c0_10, %c0_11] : memref<1x128xf32, #tpu.memory_space<vmem>>, vector<1x128xf32>
    %14 = vector.shape_cast %13 : vector<1x128xf32> to vector<1x128xf32>
    %15 = vector.broadcast %14 : vector<1x128xf32> to vector<8x128xf32>
    %c0_12 = arith.constant 0 : index
    %c0_13 = arith.constant 0 : index
    %16 = vector.load %arg8[%c0_12, %c0_13] : memref<1x128xf32, #tpu.memory_space<vmem>>, vector<1x128xf32>
    %17 = vector.shape_cast %16 : vector<1x128xf32> to vector<1x128xf32>
    %18 = vector.broadcast %17 : vector<1x128xf32> to vector<8x128xf32>
    %c0_14 = arith.constant 0 : index
    %c0_15 = arith.constant 0 : index
    %19 = vector.load %arg12[%c0_14, %c0_15] : memref<8x128xf32, #tpu.memory_space<vmem>>, vector<8x128xf32>
    %c0_16 = arith.constant 0 : index
    %c0_17 = arith.constant 0 : index
    %20 = vector.load %arg13[%c0_16, %c0_17] : memref<8x128xf32, #tpu.memory_space<vmem>>, vector<8x128xf32>
    %c0_18 = arith.constant 0 : index
    %c0_19 = arith.constant 0 : index
    %21 = vector.load %arg14[%c0_18, %c0_19] : memref<8x128xf32, #tpu.memory_space<vmem>>, vector<8x128xf32>
    %c0_i32_20 = arith.constant 0 : i32
    %22 = arith.index_cast %c0_i32_20 : i32 to index
    %c0_21 = arith.constant 0 : index
    %c0_22 = arith.constant 0 : index
    %23 = vector.load %arg11[%22, %c0_21, %c0_22] : memref<4x8x128xf32, #tpu.memory_space<vmem>>, vector<1x8x128xf32>
    %24 = vector.shape_cast %23 : vector<1x8x128xf32> to vector<8x128xf32>
    %25 = arith.mulf %19, %12 : vector<8x128xf32>
    %26 = arith.addf %25, %24 : vector<8x128xf32>
    %cst_23 = arith.constant 3.000000e-01 : f32
    %27 = vector.broadcast %cst_23 : f32 to vector<8x128xf32>
    %28 = arith.cmpf ogt, %26, %27 : vector<8x128xf32>
    %29 = arith.extui %28 : vector<8x128xi1> to vector<8x128xi32>
    %30 = arith.sitofp %29 : vector<8x128xi32> to vector<8x128xf32>
    %31 = arith.truncf %30 : vector<8x128xf32> to vector<8x128xbf16>
    %cst_24 = arith.constant 3.000000e-01 : f32
    %32 = vector.broadcast %cst_24 : f32 to vector<8x128xf32>
    %33 = arith.cmpf olt, %26, %32 : vector<8x128xf32>
    %cst_25 = arith.constant 0.000000e+00 : f32
    %34 = vector.broadcast %cst_25 : f32 to vector<8x128xf32>
    %35 = arith.select %33, %26, %34 : vector<8x128xi1>, vector<8x128xf32>
    %c0_26 = arith.constant 0 : index
    %c0_27 = arith.constant 0 : index
    %36 = vector.load %arg4[%c0_26, %c0_27] : memref<128x128xbf16, #tpu.memory_space<vmem>>, vector<128x128xbf16>
    %cst_28 = arith.constant dense<0.000000e+00> : vector<8x128xf32>
    %37 = tpu.matmul %31, %36, %cst_28 {dimension_numbers = #tpu.dot_dimension_numbers<[1], [0], [0], [1], [0, 0, 1, 1], [], []>} : vector<8x128xbf16>, vector<128x128xbf16>, vector<8x128xf32> -> vector<8x128xf32>
    %38 = arith.mulf %20, %15 : vector<8x128xf32>
    %39 = arith.addf %38, %37 : vector<8x128xf32>
    %cst_29 = arith.constant 3.000000e-01 : f32
    %40 = vector.broadcast %cst_29 : f32 to vector<8x128xf32>
    %41 = arith.cmpf ogt, %39, %40 : vector<8x128xf32>
    %42 = arith.extui %41 : vector<8x128xi1> to vector<8x128xi32>
    %43 = arith.sitofp %42 : vector<8x128xi32> to vector<8x128xf32>
    %44 = arith.truncf %43 : vector<8x128xf32> to vector<8x128xbf16>
    %cst_30 = arith.constant 3.000000e-01 : f32
    %45 = vector.broadcast %cst_30 : f32 to vector<8x128xf32>
    %46 = arith.cmpf olt, %39, %45 : vector<8x128xf32>
    %cst_31 = arith.constant 0.000000e+00 : f32
    %47 = vector.broadcast %cst_31 : f32 to vector<8x128xf32>
    %48 = arith.select %46, %39, %47 : vector<8x128xi1>, vector<8x128xf32>
    %c0_32 = arith.constant 0 : index
    %c0_33 = arith.constant 0 : index
    %49 = vector.load %arg5[%c0_32, %c0_33] : memref<128x128xbf16, #tpu.memory_space<vmem>>, vector<128x128xbf16>
    %cst_34 = arith.constant dense<0.000000e+00> : vector<8x128xf32>
    %50 = tpu.matmul %44, %49, %cst_34 {dimension_numbers = #tpu.dot_dimension_numbers<[1], [0], [0], [1], [0, 0, 1, 1], [], []>} : vector<8x128xbf16>, vector<128x128xbf16>, vector<8x128xf32> -> vector<8x128xf32>
    %51 = arith.mulf %21, %18 : vector<8x128xf32>
    %52 = arith.addf %51, %50 : vector<8x128xf32>
    %cst_35 = arith.constant 1.000000e+06 : f32
    %53 = vector.broadcast %cst_35 : f32 to vector<8x128xf32>
    %54 = arith.cmpf ogt, %52, %53 : vector<8x128xf32>
    %55 = arith.extui %54 : vector<8x128xi1> to vector<8x128xi32>
    %56 = arith.sitofp %55 : vector<8x128xi32> to vector<8x128xf32>
    %cst_36 = arith.constant 1.000000e+06 : f32
    %57 = vector.broadcast %cst_36 : f32 to vector<8x128xf32>
    %58 = arith.cmpf olt, %52, %57 : vector<8x128xf32>
    %cst_37 = arith.constant 0.000000e+00 : f32
    %59 = vector.broadcast %cst_37 : f32 to vector<8x128xf32>
    %60 = arith.select %58, %52, %59 : vector<8x128xi1>, vector<8x128xf32>
    %61 = arith.index_cast %c0_i32_20 : i32 to index
    %c0_38 = arith.constant 0 : index
    %c0_39 = arith.constant 0 : index
    %62 = vector.load %arg9[%61, %c0_38, %c0_39] : memref<4x8x128xf32, #tpu.memory_space<vmem>>, vector<1x8x128xf32>
    %63 = vector.shape_cast %62 : vector<1x8x128xf32> to vector<8x128xf32>
    %64 = vector.shape_cast %60 : vector<8x128xf32> to vector<1x8x128xf32>
    tpu.vector_store %arg9[%61, %c0_38, %c0_39], %64 {strides = array<i32>} : memref<4x8x128xf32, #tpu.memory_space<vmem>>, vector<1x8x128xf32>,
    %65 = arith.index_cast %c0_i32_20 : i32 to index
    %c0_40 = arith.constant 0 : index
    %c0_41 = arith.constant 0 : index
    %66 = vector.load %arg10[%65, %c0_40, %c0_41] : memref<4x8x128xf32, #tpu.memory_space<vmem>>, vector<1x8x128xf32>
    %67 = vector.shape_cast %66 : vector<1x8x128xf32> to vector<8x128xf32>
    %68 = vector.shape_cast %56 : vector<8x128xf32> to vector<1x8x128xf32>
    tpu.vector_store %arg10[%65, %c0_40, %c0_41], %68 {strides = array<i32>} : memref<4x8x128xf32, #tpu.memory_space<vmem>>, vector<1x8x128xf32>,
    %c1_i32 = arith.constant 1 : i32
    %69 = arith.index_cast %c1_i32 : i32 to index
    %c0_42 = arith.constant 0 : index
    %c0_43 = arith.constant 0 : index
    %70 = vector.load %arg11[%69, %c0_42, %c0_43] : memref<4x8x128xf32, #tpu.memory_space<vmem>>, vector<1x8x128xf32>
    %71 = vector.shape_cast %70 : vector<1x8x128xf32> to vector<8x128xf32>
    %72 = arith.mulf %35, %12 : vector<8x128xf32>
    %73 = arith.addf %72, %71 : vector<8x128xf32>
    %cst_44 = arith.constant 3.000000e-01 : f32
    %74 = vector.broadcast %cst_44 : f32 to vector<8x128xf32>
    %75 = arith.cmpf ogt, %73, %74 : vector<8x128xf32>
    %76 = arith.extui %75 : vector<8x128xi1> to vector<8x128xi32>
    %77 = arith.sitofp %76 : vector<8x128xi32> to vector<8x128xf32>
    %78 = arith.truncf %77 : vector<8x128xf32> to vector<8x128xbf16>
    %cst_45 = arith.constant 3.000000e-01 : f32
    %79 = vector.broadcast %cst_45 : f32 to vector<8x128xf32>
    %80 = arith.cmpf olt, %73, %79 : vector<8x128xf32>
    %cst_46 = arith.constant 0.000000e+00 : f32
    %81 = vector.broadcast %cst_46 : f32 to vector<8x128xf32>
    %82 = arith.select %80, %73, %81 : vector<8x128xi1>, vector<8x128xf32>
    %c0_47 = arith.constant 0 : index
    %c0_48 = arith.constant 0 : index
    %83 = vector.load %arg4[%c0_47, %c0_48] : memref<128x128xbf16, #tpu.memory_space<vmem>>, vector<128x128xbf16>
    %cst_49 = arith.constant dense<0.000000e+00> : vector<8x128xf32>
    %84 = tpu.matmul %78, %83, %cst_49 {dimension_numbers = #tpu.dot_dimension_numbers<[1], [0], [0], [1], [0, 0, 1, 1], [], []>} : vector<8x128xbf16>, vector<128x128xbf16>, vector<8x128xf32> -> vector<8x128xf32>
    %85 = arith.mulf %48, %15 : vector<8x128xf32>
    %86 = arith.addf %85, %84 : vector<8x128xf32>
    %cst_50 = arith.constant 3.000000e-01 : f32
    %87 = vector.broadcast %cst_50 : f32 to vector<8x128xf32>
    %88 = arith.cmpf ogt, %86, %87 : vector<8x128xf32>
    %89 = arith.extui %88 : vector<8x128xi1> to vector<8x128xi32>
    %90 = arith.sitofp %89 : vector<8x128xi32> to vector<8x128xf32>
    %91 = arith.truncf %90 : vector<8x128xf32> to vector<8x128xbf16>
    %cst_51 = arith.constant 3.000000e-01 : f32
    %92 = vector.broadcast %cst_51 : f32 to vector<8x128xf32>
    %93 = arith.cmpf olt, %86, %92 : vector<8x128xf32>
    %cst_52 = arith.constant 0.000000e+00 : f32
    %94 = vector.broadcast %cst_52 : f32 to vector<8x128xf32>
    %95 = arith.select %93, %86, %94 : vector<8x128xi1>, vector<8x128xf32>
    %c0_53 = arith.constant 0 : index
    %c0_54 = arith.constant 0 : index
    %96 = vector.load %arg5[%c0_53, %c0_54] : memref<128x128xbf16, #tpu.memory_space<vmem>>, vector<128x128xbf16>
    %cst_55 = arith.constant dense<0.000000e+00> : vector<8x128xf32>
    %97 = tpu.matmul %91, %96, %cst_55 {dimension_numbers = #tpu.dot_dimension_numbers<[1], [0], [0], [1], [0, 0, 1, 1], [], []>} : vector<8x128xbf16>, vector<128x128xbf16>, vector<8x128xf32> -> vector<8x128xf32>
    %98 = arith.mulf %60, %18 : vector<8x128xf32>
    %99 = arith.addf %98, %97 : vector<8x128xf32>
    %cst_56 = arith.constant 1.000000e+06 : f32
    %100 = vector.broadcast %cst_56 : f32 to vector<8x128xf32>
    %101 = arith.cmpf ogt, %99, %100 : vector<8x128xf32>
    %102 = arith.extui %101 : vector<8x128xi1> to vector<8x128xi32>
    %103 = arith.sitofp %102 : vector<8x128xi32> to vector<8x128xf32>
    %cst_57 = arith.constant 1.000000e+06 : f32
    %104 = vector.broadcast %cst_57 : f32 to vector<8x128xf32>
    %105 = arith.cmpf olt, %99, %104 : vector<8x128xf32>
    %cst_58 = arith.constant 0.000000e+00 : f32
    %106 = vector.broadcast %cst_58 : f32 to vector<8x128xf32>
    %107 = arith.select %105, %99, %106 : vector<8x128xi1>, vector<8x128xf32>
    %108 = arith.index_cast %c1_i32 : i32 to index
    %c0_59 = arith.constant 0 : index
    %c0_60 = arith.constant 0 : index
    %109 = vector.load %arg9[%108, %c0_59, %c0_60] : memref<4x8x128xf32, #tpu.memory_space<vmem>>, vector<1x8x128xf32>
    %110 = vector.shape_cast %109 : vector<1x8x128xf32> to vector<8x128xf32>
    %111 = vector.shape_cast %107 : vector<8x128xf32> to vector<1x8x128xf32>
    tpu.vector_store %arg9[%108, %c0_59, %c0_60], %111 {strides = array<i32>} : memref<4x8x128xf32, #tpu.memory_space<vmem>>, vector<1x8x128xf32>,
    %112 = arith.index_cast %c1_i32 : i32 to index
    %c0_61 = arith.constant 0 : index
    %c0_62 = arith.constant 0 : index
    %113 = vector.load %arg10[%112, %c0_61, %c0_62] : memref<4x8x128xf32, #tpu.memory_space<vmem>>, vector<1x8x128xf32>
    %114 = vector.shape_cast %113 : vector<1x8x128xf32> to vector<8x128xf32>
    %115 = vector.shape_cast %103 : vector<8x128xf32> to vector<1x8x128xf32>
    tpu.vector_store %arg10[%112, %c0_61, %c0_62], %115 {strides = array<i32>} : memref<4x8x128xf32, #tpu.memory_space<vmem>>, vector<1x8x128xf32>,
    %c2_i32 = arith.constant 2 : i32
    %116 = arith.index_cast %c2_i32 : i32 to index
    %c0_63 = arith.constant 0 : index
    %c0_64 = arith.constant 0 : index
    %117 = vector.load %arg11[%116, %c0_63, %c0_64] : memref<4x8x128xf32, #tpu.memory_space<vmem>>, vector<1x8x128xf32>
    %118 = vector.shape_cast %117 : vector<1x8x128xf32> to vector<8x128xf32>
    %119 = arith.mulf %82, %12 : vector<8x128xf32>
    %120 = arith.addf %119, %118 : vector<8x128xf32>
    %cst_65 = arith.constant 3.000000e-01 : f32
    %121 = vector.broadcast %cst_65 : f32 to vector<8x128xf32>
    %122 = arith.cmpf ogt, %120, %121 : vector<8x128xf32>
    %123 = arith.extui %122 : vector<8x128xi1> to vector<8x128xi32>
    %124 = arith.sitofp %123 : vector<8x128xi32> to vector<8x128xf32>
    %125 = arith.truncf %124 : vector<8x128xf32> to vector<8x128xbf16>
    %cst_66 = arith.constant 3.000000e-01 : f32
    %126 = vector.broadcast %cst_66 : f32 to vector<8x128xf32>
    %127 = arith.cmpf olt, %120, %126 : vector<8x128xf32>
    %cst_67 = arith.constant 0.000000e+00 : f32
    %128 = vector.broadcast %cst_67 : f32 to vector<8x128xf32>
    %129 = arith.select %127, %120, %128 : vector<8x128xi1>, vector<8x128xf32>
    %c0_68 = arith.constant 0 : index
    %c0_69 = arith.constant 0 : index
    %130 = vector.load %arg4[%c0_68, %c0_69] : memref<128x128xbf16, #tpu.memory_space<vmem>>, vector<128x128xbf16>
    %cst_70 = arith.constant dense<0.000000e+00> : vector<8x128xf32>
    %131 = tpu.matmul %125, %130, %cst_70 {dimension_numbers = #tpu.dot_dimension_numbers<[1], [0], [0], [1], [0, 0, 1, 1], [], []>} : vector<8x128xbf16>, vector<128x128xbf16>, vector<8x128xf32> -> vector<8x128xf32>
    %132 = arith.mulf %95, %15 : vector<8x128xf32>
    %133 = arith.addf %132, %131 : vector<8x128xf32>
    %cst_71 = arith.constant 3.000000e-01 : f32
    %134 = vector.broadcast %cst_71 : f32 to vector<8x128xf32>
    %135 = arith.cmpf ogt, %133, %134 : vector<8x128xf32>
    %136 = arith.extui %135 : vector<8x128xi1> to vector<8x128xi32>
    %137 = arith.sitofp %136 : vector<8x128xi32> to vector<8x128xf32>
    %138 = arith.truncf %137 : vector<8x128xf32> to vector<8x128xbf16>
    %cst_72 = arith.constant 3.000000e-01 : f32
    %139 = vector.broadcast %cst_72 : f32 to vector<8x128xf32>
    %140 = arith.cmpf olt, %133, %139 : vector<8x128xf32>
    %cst_73 = arith.constant 0.000000e+00 : f32
    %141 = vector.broadcast %cst_73 : f32 to vector<8x128xf32>
    %142 = arith.select %140, %133, %141 : vector<8x128xi1>, vector<8x128xf32>
    %c0_74 = arith.constant 0 : index
    %c0_75 = arith.constant 0 : index
    %143 = vector.load %arg5[%c0_74, %c0_75] : memref<128x128xbf16, #tpu.memory_space<vmem>>, vector<128x128xbf16>
    %cst_76 = arith.constant dense<0.000000e+00> : vector<8x128xf32>
    %144 = tpu.matmul %138, %143, %cst_76 {dimension_numbers = #tpu.dot_dimension_numbers<[1], [0], [0], [1], [0, 0, 1, 1], [], []>} : vector<8x128xbf16>, vector<128x128xbf16>, vector<8x128xf32> -> vector<8x128xf32>
    %145 = arith.mulf %107, %18 : vector<8x128xf32>
    %146 = arith.addf %145, %144 : vector<8x128xf32>
    %cst_77 = arith.constant 1.000000e+06 : f32
    %147 = vector.broadcast %cst_77 : f32 to vector<8x128xf32>
    %148 = arith.cmpf ogt, %146, %147 : vector<8x128xf32>
    %149 = arith.extui %148 : vector<8x128xi1> to vector<8x128xi32>
    %150 = arith.sitofp %149 : vector<8x128xi32> to vector<8x128xf32>
    %cst_78 = arith.constant 1.000000e+06 : f32
    %151 = vector.broadcast %cst_78 : f32 to vector<8x128xf32>
    %152 = arith.cmpf olt, %146, %151 : vector<8x128xf32>
    %cst_79 = arith.constant 0.000000e+00 : f32
    %153 = vector.broadcast %cst_79 : f32 to vector<8x128xf32>
    %154 = arith.select %152, %146, %153 : vector<8x128xi1>, vector<8x128xf32>
    %155 = arith.index_cast %c2_i32 : i32 to index
    %c0_80 = arith.constant 0 : index
    %c0_81 = arith.constant 0 : index
    %156 = vector.load %arg9[%155, %c0_80, %c0_81] : memref<4x8x128xf32, #tpu.memory_space<vmem>>, vector<1x8x128xf32>
    %157 = vector.shape_cast %156 : vector<1x8x128xf32> to vector<8x128xf32>
    %158 = vector.shape_cast %154 : vector<8x128xf32> to vector<1x8x128xf32>
    tpu.vector_store %arg9[%155, %c0_80, %c0_81], %158 {strides = array<i32>} : memref<4x8x128xf32, #tpu.memory_space<vmem>>, vector<1x8x128xf32>,
    %159 = arith.index_cast %c2_i32 : i32 to index
    %c0_82 = arith.constant 0 : index
    %c0_83 = arith.constant 0 : index
    %160 = vector.load %arg10[%159, %c0_82, %c0_83] : memref<4x8x128xf32, #tpu.memory_space<vmem>>, vector<1x8x128xf32>
    %161 = vector.shape_cast %160 : vector<1x8x128xf32> to vector<8x128xf32>
    %162 = vector.shape_cast %150 : vector<8x128xf32> to vector<1x8x128xf32>
    tpu.vector_store %arg10[%159, %c0_82, %c0_83], %162 {strides = array<i32>} : memref<4x8x128xf32, #tpu.memory_space<vmem>>, vector<1x8x128xf32>,
    %c3_i32 = arith.constant 3 : i32
    %163 = arith.index_cast %c3_i32 : i32 to index
    %c0_84 = arith.constant 0 : index
    %c0_85 = arith.constant 0 : index
    %164 = vector.load %arg11[%163, %c0_84, %c0_85] : memref<4x8x128xf32, #tpu.memory_space<vmem>>, vector<1x8x128xf32>
    %165 = vector.shape_cast %164 : vector<1x8x128xf32> to vector<8x128xf32>
    %166 = arith.mulf %129, %12 : vector<8x128xf32>
    %167 = arith.addf %166, %165 : vector<8x128xf32>
    %cst_86 = arith.constant 3.000000e-01 : f32
    %168 = vector.broadcast %cst_86 : f32 to vector<8x128xf32>
    %169 = arith.cmpf ogt, %167, %168 : vector<8x128xf32>
    %170 = arith.extui %169 : vector<8x128xi1> to vector<8x128xi32>
    %171 = arith.sitofp %170 : vector<8x128xi32> to vector<8x128xf32>
    %172 = arith.truncf %171 : vector<8x128xf32> to vector<8x128xbf16>
    %cst_87 = arith.constant 3.000000e-01 : f32
    %173 = vector.broadcast %cst_87 : f32 to vector<8x128xf32>
    %174 = arith.cmpf olt, %167, %173 : vector<8x128xf32>
    %cst_88 = arith.constant 0.000000e+00 : f32
    %175 = vector.broadcast %cst_88 : f32 to vector<8x128xf32>
    %176 = arith.select %174, %167, %175 : vector<8x128xi1>, vector<8x128xf32>
    %c0_89 = arith.constant 0 : index
    %c0_90 = arith.constant 0 : index
    %177 = vector.load %arg4[%c0_89, %c0_90] : memref<128x128xbf16, #tpu.memory_space<vmem>>, vector<128x128xbf16>
    %cst_91 = arith.constant dense<0.000000e+00> : vector<8x128xf32>
    %178 = tpu.matmul %172, %177, %cst_91 {dimension_numbers = #tpu.dot_dimension_numbers<[1], [0], [0], [1], [0, 0, 1, 1], [], []>} : vector<8x128xbf16>, vector<128x128xbf16>, vector<8x128xf32> -> vector<8x128xf32>
    %179 = arith.mulf %142, %15 : vector<8x128xf32>
    %180 = arith.addf %179, %178 : vector<8x128xf32>
    %cst_92 = arith.constant 3.000000e-01 : f32
    %181 = vector.broadcast %cst_92 : f32 to vector<8x128xf32>
    %182 = arith.cmpf ogt, %180, %181 : vector<8x128xf32>
    %183 = arith.extui %182 : vector<8x128xi1> to vector<8x128xi32>
    %184 = arith.sitofp %183 : vector<8x128xi32> to vector<8x128xf32>
    %185 = arith.truncf %184 : vector<8x128xf32> to vector<8x128xbf16>
    %cst_93 = arith.constant 3.000000e-01 : f32
    %186 = vector.broadcast %cst_93 : f32 to vector<8x128xf32>
    %187 = arith.cmpf olt, %180, %186 : vector<8x128xf32>
    %cst_94 = arith.constant 0.000000e+00 : f32
    %188 = vector.broadcast %cst_94 : f32 to vector<8x128xf32>
    %189 = arith.select %187, %180, %188 : vector<8x128xi1>, vector<8x128xf32>
    %c0_95 = arith.constant 0 : index
    %c0_96 = arith.constant 0 : index
    %190 = vector.load %arg5[%c0_95, %c0_96] : memref<128x128xbf16, #tpu.memory_space<vmem>>, vector<128x128xbf16>
    %cst_97 = arith.constant dense<0.000000e+00> : vector<8x128xf32>
    %191 = tpu.matmul %185, %190, %cst_97 {dimension_numbers = #tpu.dot_dimension_numbers<[1], [0], [0], [1], [0, 0, 1, 1], [], []>} : vector<8x128xbf16>, vector<128x128xbf16>, vector<8x128xf32> -> vector<8x128xf32>
    %192 = arith.mulf %154, %18 : vector<8x128xf32>
    %193 = arith.addf %192, %191 : vector<8x128xf32>
    %cst_98 = arith.constant 1.000000e+06 : f32
    %194 = vector.broadcast %cst_98 : f32 to vector<8x128xf32>
    %195 = arith.cmpf ogt, %193, %194 : vector<8x128xf32>
    %196 = arith.extui %195 : vector<8x128xi1> to vector<8x128xi32>
    %197 = arith.sitofp %196 : vector<8x128xi32> to vector<8x128xf32>
    %cst_99 = arith.constant 1.000000e+06 : f32
    %198 = vector.broadcast %cst_99 : f32 to vector<8x128xf32>
    %199 = arith.cmpf olt, %193, %198 : vector<8x128xf32>
    %cst_100 = arith.constant 0.000000e+00 : f32
    %200 = vector.broadcast %cst_100 : f32 to vector<8x128xf32>
    %201 = arith.select %199, %193, %200 : vector<8x128xi1>, vector<8x128xf32>
    %202 = arith.index_cast %c3_i32 : i32 to index
    %c0_101 = arith.constant 0 : index
    %c0_102 = arith.constant 0 : index
    %203 = vector.load %arg9[%202, %c0_101, %c0_102] : memref<4x8x128xf32, #tpu.memory_space<vmem>>, vector<1x8x128xf32>
    %204 = vector.shape_cast %203 : vector<1x8x128xf32> to vector<8x128xf32>
    %205 = vector.shape_cast %201 : vector<8x128xf32> to vector<1x8x128xf32>
    tpu.vector_store %arg9[%202, %c0_101, %c0_102], %205 {strides = array<i32>} : memref<4x8x128xf32, #tpu.memory_space<vmem>>, vector<1x8x128xf32>,
    %206 = arith.index_cast %c3_i32 : i32 to index
    %c0_103 = arith.constant 0 : index
    %c0_104 = arith.constant 0 : index
    %207 = vector.load %arg10[%206, %c0_103, %c0_104] : memref<4x8x128xf32, #tpu.memory_space<vmem>>, vector<1x8x128xf32>
    %208 = vector.shape_cast %207 : vector<1x8x128xf32> to vector<8x128xf32>
    %209 = vector.shape_cast %197 : vector<8x128xf32> to vector<1x8x128xf32>
    tpu.vector_store %arg10[%206, %c0_103, %c0_104], %209 {strides = array<i32>} : memref<4x8x128xf32, #tpu.memory_space<vmem>>, vector<1x8x128xf32>,
    %c4_i32 = arith.constant 4 : i32
    %c0_105 = arith.constant 0 : index
    %c0_106 = arith.constant 0 : index
    %210 = vector.load %arg12[%c0_105, %c0_106] : memref<8x128xf32, #tpu.memory_space<vmem>>, vector<8x128xf32>
    tpu.vector_store %arg12[%c0_105, %c0_106], %176 {strides = array<i32>} : memref<8x128xf32, #tpu.memory_space<vmem>>, vector<8x128xf32>,
    %c0_107 = arith.constant 0 : index
    %c0_108 = arith.constant 0 : index
    %211 = vector.load %arg13[%c0_107, %c0_108] : memref<8x128xf32, #tpu.memory_space<vmem>>, vector<8x128xf32>
    tpu.vector_store %arg13[%c0_107, %c0_108], %189 {strides = array<i32>} : memref<8x128xf32, #tpu.memory_space<vmem>>, vector<8x128xf32>,
    %c0_109 = arith.constant 0 : index
    %c0_110 = arith.constant 0 : index
    %212 = vector.load %arg14[%c0_109, %c0_110] : memref<8x128xf32, #tpu.memory_space<vmem>>, vector<8x128xf32>
    tpu.vector_store %arg14[%c0_109, %c0_110], %201 {strides = array<i32>} : memref<8x128xf32, #tpu.memory_space<vmem>>, vector<8x128xf32>,
    return
  }
  func.func @transform_0(%arg0: i32, %arg1: i32) -> (i32, i32, i32) {
    %c0_i32 = arith.constant 0 : i32
    %c0_i32_0 = arith.constant 0 : i32
    return %arg1, %arg0, %c0_i32 : i32, i32, i32
  }
  func.func @transform_1(%arg0: i32, %arg1: i32) -> (i32, i32) {
    %c0_i32 = arith.constant 0 : i32
    %c0_i32_0 = arith.constant 0 : i32
    %c0_i32_1 = arith.constant 0 : i32
    return %c0_i32, %c0_i32_0 : i32, i32
  }
  func.func @transform_2(%arg0: i32, %arg1: i32) -> (i32, i32) {
    %c0_i32 = arith.constant 0 : i32
    %c0_i32_0 = arith.constant 0 : i32
    %c0_i32_1 = arith.constant 0 : i32
    return %c0_i32, %c0_i32_0 : i32, i32
  }
  func.func @transform_3(%arg0: i32, %arg1: i32) -> (i32, i32) {
    %c0_i32 = arith.constant 0 : i32
    %c0_i32_0 = arith.constant 0 : i32
    %c0_i32_1 = arith.constant 0 : i32
    return %c0_i32, %c0_i32_0 : i32, i32
  }
  func.func @transform_4(%arg0: i32, %arg1: i32) -> (i32, i32) {
    %c0_i32 = arith.constant 0 : i32
    %c0_i32_0 = arith.constant 0 : i32
    %c0_i32_1 = arith.constant 0 : i32
    return %c0_i32, %c0_i32_0 : i32, i32
  }
  func.func @transform_5(%arg0: i32, %arg1: i32) -> (i32, i32) {
    %c0_i32 = arith.constant 0 : i32
    %c0_i32_0 = arith.constant 0 : i32
    %c0_i32_1 = arith.constant 0 : i32
    return %c0_i32, %c0_i32_0 : i32, i32
  }
  func.func @transform_6(%arg0: i32, %arg1: i32) -> (i32, i32) {
    %c0_i32 = arith.constant 0 : i32
    %c0_i32_0 = arith.constant 0 : i32
    %c0_i32_1 = arith.constant 0 : i32
    return %c0_i32, %c0_i32_0 : i32, i32
  }
  func.func @transform_7(%arg0: i32, %arg1: i32) -> (i32, i32, i32) {
    %c0_i32 = arith.constant 0 : i32
    %c0_i32_0 = arith.constant 0 : i32
    return %arg1, %arg0, %c0_i32 : i32, i32, i32
  }
  func.func @transform_8(%arg0: i32, %arg1: i32) -> (i32, i32, i32) {
    %c0_i32 = arith.constant 0 : i32
    %c0_i32_0 = arith.constant 0 : i32
    return %arg1, %arg0, %c0_i32 : i32, i32, i32
  }
}

</mosaic_0001>

<llo_original>
// kernel: tpu_custom_call.1
$region0: #{tpu_custom_call.1}
  #allocation0 [shape = 'u32[]', space=smem, size = 0x4, offset = 0x4, fixed_abs, tag = 'smem constant byte address 0x4 - core index']
  #allocation1 [shape = 'u32[144,128]{1,0:T(1,128)}', space=vmem, size = 0x12000, scoped, tag = 'internal scratch']
  #allocation2 [shape = 'f32[4,8,128]{2,1,0:T(8,128)}', space=vmem, size = 0x4000, scoped, tag = 'scratch operand']
  #allocation3 [shape = 'f32[8,128]{1,0:T(8,128)}', space=vmem, size = 0x1000, scoped, tag = 'scratch operand']
  #allocation4 [shape = 'f32[8,128]{1,0:T(8,128)}', space=vmem, size = 0x1000, scoped, tag = 'scratch operand']
  #allocation5 [shape = 'f32[8,128]{1,0:T(8,128)}', space=vmem, size = 0x1000, scoped, tag = 'scratch operand']
  %s0 = inlined_call_operand.hbm [shape: f32[8,8,16], index: 0, kind: input, shape index: {}]
  %s1 = inlined_call_operand.hbm [shape: bf16[16,128], index: 1, kind: input, shape index: {}]
  %s2 = inlined_call_operand.hbm [shape: bf16[128,128], index: 2, kind: input, shape index: {}]
  %s3 = inlined_call_operand.hbm [shape: bf16[128,128], index: 3, kind: input, shape index: {}]
  %s4 = inlined_call_operand.hbm [shape: f32[1,128], index: 4, kind: input, shape index: {}]
  %s5 = inlined_call_operand.hbm [shape: f32[1,128], index: 5, kind: input, shape index: {}]
  %s6 = inlined_call_operand.hbm [shape: f32[1,128], index: 6, kind: input, shape index: {}]
  %s7 = inlined_call_operand.hbm [shape: f32[8,8,128], index: 7, kind: output, shape index: {0}]
  %s8 = inlined_call_operand.hbm [shape: f32[8,8,128], index: 8, kind: output, shape index: {1}]
  %9 = xla_tuple %s7, %s8
  %s10 = sld [smem:[#allocation0]]
  $region101: #{tpu_custom_call.1} parent=0
    _
  %s12 = ssub.s32 1, %s10
  %s13 = scalar_select 0, %s12, %s10
  $region1: #{tpu_custom_call.1} parent=0
    #allocation6 [shape = 'u8[32768]{0}', space=vmem, size = 0x8000, scoped, tag = 'input window, operand 0']
    #allocation7 [shape = 's32[2]{0}', space=sflag, size = 0x8, scoped, tag = 'scoped memory for tpu_custom_call.1']
    #allocation8 [shape = 's32[2]{0}', space=sflag, size = 0x8, scoped, tag = 'scoped memory for tpu_custom_call.1']
    #allocation9 [shape = 'u8[4096]{0}', space=vmem, size = 0x1000, scoped, tag = 'input window, operand 1, single buffered']
    #allocation10 [shape = 's32[1]{0}', space=sflag, size = 0x4, scoped, tag = 'scoped memory for tpu_custom_call.1']
    #allocation11 [shape = 'u8[32768]{0}', space=vmem, size = 0x8000, scoped, tag = 'input window, operand 2, single buffered']
    #allocation12 [shape = 'u8[32768]{0}', space=vmem, size = 0x8000, scoped, tag = 'input window, operand 3, single buffered']
    #allocation13 [shape = 's32[1]{0}', space=sflag, size = 0x4, scoped, tag = 'scoped memory for tpu_custom_call.1']
    #allocation14 [shape = 'u8[512]{0}', space=vmem, size = 0x400, scoped, tag = 'input window, operand 4, single buffered']
    #allocation15 [shape = 'u8[512]{0}', space=vmem, size = 0x400, scoped, tag = 'input window, operand 5, single buffered']
    #allocation16 [shape = 's32[1]{0}', space=sflag, size = 0x4, scoped, tag = 'scoped memory for tpu_custom_call.1']
    #allocation17 [shape = 'u8[512]{0}', space=vmem, size = 0x400, scoped, tag = 'input window, operand 6, single buffered']
    #allocation18 [shape = 'u8[32768]{0}', space=vmem, size = 0x8000, scoped, tag = 'output window, operand 0']
    #allocation19 [shape = 'u8[32768]{0}', space=vmem, size = 0x8000, scoped, tag = 'output window, operand 1']
    #allocation20 [shape = 's32[2]{0}', space=sflag, size = 0x8, scoped, tag = 'scoped memory for tpu_custom_call.1']
    %14 = vsyncpa [#allocation7], 0
    %s15 = scalar_lea.sflag [#allocation7], 1
    %16 = vsyncpa %s15, 0
    %17 = vsyncpa [#allocation10], 0
    %18 = vsyncpa [#allocation13], 0
    %19 = vsyncpa [#allocation16], 0
    %20 = vsyncpa [#allocation8], 0
    %s21 = scalar_lea.sflag [#allocation8], 1
    %22 = vsyncpa %s21, 0
    %23 = vsyncpa [#allocation20], 0
    %s24 = scalar_lea.sflag [#allocation20], 1
    %25 = vsyncpa %s24, 0
    loop: start=0, step=1, limit=4
    $region2: #{tpu_custom_call.1} parent=1 // loop_pre_header
      _
    $region3: #{tpu_custom_call.1} parent=1 // loop_header
      %s27 = sphi 0, %s31
      %p28 = scmp.ge.s32.totalorder %s27, 4
      %s34 = sphi 0, %s46
      %s35 = sphi 0, %s42
      %s36 = sphi 0, %s34
      %s37 = sphi 0, %s35
      %s38 = sphi 0, %s36
      %s39 = sphi 0, %s37
      %s51 = sphi 0, %s53
      %s54 = sphi 0, %s51
      %s55 = sphi 0, %s54
      %s71 = sphi 0, %s55
      %s75 = sphi 0, %s75
      %s77 = sphi 0, %s75
      %s78 = sphi 0, %s77
      %s92 = sphi 0, %s78
      %s96 = sphi 0, %s96
      %s98 = sphi 0, %s96
      %s99 = sphi 0, %s98
      %s113 = sphi 0, %s99
      %s117 = sphi 0, %s117
      %s119 = sphi 0, %s117
      %s120 = sphi 0, %s119
      %s134 = sphi 0, %s120
      %s138 = sphi 0, %s138
      %s140 = sphi 0, %s138
      %s141 = sphi 0, %s140
      %s155 = sphi 0, %s141
      %s159 = sphi 0, %s159
      %s161 = sphi 0, %s159
      %s162 = sphi 0, %s161
      %s176 = sphi 0, %s162
      %s180 = sphi 0, %s180
      %s182 = sphi 0, %s180
      %s183 = sphi 0, %s182
      %s197 = sphi 0, %s183
      %s205 = sphi 0, %s207
      %s208 = sphi 0, %s205
      %s209 = sphi 0, %s208
      %s225 = sphi 0, %s209
      %s233 = sphi 0, %s235
      %s236 = sphi 0, %s233
      %s237 = sphi 0, %s236
      %s253 = sphi 0, %s237
    $region4: #{tpu_custom_call.1} parent=1 // loop_header_branch
      %30 = sbr.rel (%p28) target = $region8
    $region5: #{tpu_custom_call.1} parent=1 // loop_body
      %s32 = ssub.s32 %s27, 1
      %s33 = ssub.s32 %s27, 2
      %s40 = sadd.s32 1, %s35
      %p41 = scmp.ge.s32.totalorder %s40, 2
      %s42 = scalar_select %p41, 0, %s40
      %s43 = sadd.s32 1, %s34
      %s44 = scalar_select %p41, %s43, %s34
      %p45 = scmp.ge.s32.totalorder %s44, 1
      %s46 = scalar_select %p45, 0, %s44
      %s47 = ssub.s32 %s35, %s42
      %s48 = ssub.s32 %s34, %s46
      %s49 = sor.u32 %s47, %s48
      %p50 = scmp.eq.s32.totalorder %s49, 0
      %s52 = sadd.s32 %s51, 1
      %s53 = scalar_select %p50, %s51, %s52
      %p56 = pneg %p50
      %p57 = scmp.eq.s32.totalorder %s27, 1
      %p58 = por %p56, %p57
      %p59 = scmp.ne.s32.totalorder %s51, %s54
      %p60 = scmp.eq.s32.totalorder %s27, 0
      %p61 = por %p59, %p60
      %p62 = scmp.ne.s32.totalorder %s51, %s54
      %p63 = scmp.eq.s32.totalorder %s32, 1
      %p64 = por %p62, %p63
      %p65 = scmp.ne.s32.totalorder %s54, %s55
      %p66 = scmp.eq.s32.totalorder %s32, 0
      %p67 = por %p65, %p66
      %p68 = scmp.ne.s32.totalorder %s54, %s55
      %p69 = scmp.eq.s32.totalorder %s33, 1
      %p70 = por %p68, %p69
      %p72 = scmp.ne.s32.totalorder %s55, %s71
      %p73 = scmp.eq.s32.totalorder %s33, 0
      %p74 = por %p72, %p73
      %s76 = sadd.s32 %s75, 1
      %p79 = scmp.eq.s32.totalorder %s27, 1
      %p80 = scmp.ne.s32.totalorder %s75, %s77
      %p81 = scmp.eq.s32.totalorder %s27, 0
      %p82 = por %p80, %p81
      %p83 = scmp.ne.s32.totalorder %s75, %s77
      %p84 = scmp.eq.s32.totalorder %s32, 1
      %p85 = por %p83, %p84
      %p86 = scmp.ne.s32.totalorder %s77, %s78
      %p87 = scmp.eq.s32.totalorder %s32, 0
      %p88 = por %p86, %p87
      %p89 = scmp.ne.s32.totalorder %s77, %s78
      %p90 = scmp.eq.s32.totalorder %s33, 1
      %p91 = por %p89, %p90
      %p93 = scmp.ne.s32.totalorder %s78, %s92
      %p94 = scmp.eq.s32.totalorder %s33, 0
      %p95 = por %p93, %p94
      %s97 = sadd.s32 %s96, 1
      %p100 = scmp.eq.s32.totalorder %s27, 1
      %p101 = scmp.ne.s32.totalorder %s96, %s98
      %p102 = scmp.eq.s32.totalorder %s27, 0
      %p103 = por %p101, %p102
      %p104 = scmp.ne.s32.totalorder %s96, %s98
      %p105 = scmp.eq.s32.totalorder %s32, 1
      %p106 = por %p104, %p105
      %p107 = scmp.ne.s32.totalorder %s98, %s99
      %p108 = scmp.eq.s32.totalorder %s32, 0
      %p109 = por %p107, %p108
      %p110 = scmp.ne.s32.totalorder %s98, %s99
      %p111 = scmp.eq.s32.totalorder %s33, 1
      %p112 = por %p110, %p111
      %p114 = scmp.ne.s32.totalorder %s99, %s113
      %p115 = scmp.eq.s32.totalorder %s33, 0
      %p116 = por %p114, %p115
      %s118 = sadd.s32 %s117, 1
      %p121 = scmp.eq.s32.totalorder %s27, 1
      %p122 = scmp.ne.s32.totalorder %s117, %s119
      %p123 = scmp.eq.s32.totalorder %s27, 0
      %p124 = por %p122, %p123
      %p125 = scmp.ne.s32.totalorder %s117, %s119
      %p126 = scmp.eq.s32.totalorder %s32, 1
      %p127 = por %p125, %p126
      %p128 = scmp.ne.s32.totalorder %s119, %s120
      %p129 = scmp.eq.s32.totalorder %s32, 0
      %p130 = por %p128, %p129
      %p131 = scmp.ne.s32.totalorder %s119, %s120
      %p132 = scmp.eq.s32.totalorder %s33, 1
      %p133 = por %p131, %p132
      %p135 = scmp.ne.s32.totalorder %s120, %s134
      %p136 = scmp.eq.s32.totalorder %s33, 0
      %p137 = por %p135, %p136
      %s139 = sadd.s32 %s138, 1
      %p142 = scmp.eq.s32.totalorder %s27, 1
      %p143 = scmp.ne.s32.totalorder %s138, %s140
      %p144 = scmp.eq.s32.totalorder %s27, 0
      %p145 = por %p143, %p144
      %p146 = scmp.ne.s32.totalorder %s138, %s140
      %p147 = scmp.eq.s32.totalorder %s32, 1
      %p148 = por %p146, %p147
      %p149 = scmp.ne.s32.totalorder %s140, %s141
      %p150 = scmp.eq.s32.totalorder %s32, 0
      %p151 = por %p149, %p150
      %p152 = scmp.ne.s32.totalorder %s140, %s141
      %p153 = scmp.eq.s32.totalorder %s33, 1
      %p154 = por %p152, %p153
      %p156 = scmp.ne.s32.totalorder %s141, %s155
      %p157 = scmp.eq.s32.totalorder %s33, 0
      %p158 = por %p156, %p157
      %s160 = sadd.s32 %s159, 1
      %p163 = scmp.eq.s32.totalorder %s27, 1
      %p164 = scmp.ne.s32.totalorder %s159, %s161
      %p165 = scmp.eq.s32.totalorder %s27, 0
      %p166 = por %p164, %p165
      %p167 = scmp.ne.s32.totalorder %s159, %s161
      %p168 = scmp.eq.s32.totalorder %s32, 1
      %p169 = por %p167, %p168
      %p170 = scmp.ne.s32.totalorder %s161, %s162
      %p171 = scmp.eq.s32.totalorder %s32, 0
      %p172 = por %p170, %p171
      %p173 = scmp.ne.s32.totalorder %s161, %s162
      %p174 = scmp.eq.s32.totalorder %s33, 1
      %p175 = por %p173, %p174
      %p177 = scmp.ne.s32.totalorder %s162, %s176
      %p178 = scmp.eq.s32.totalorder %s33, 0
      %p179 = por %p177, %p178
      %s181 = sadd.s32 %s180, 1
      %p184 = scmp.eq.s32.totalorder %s27, 1
      %p185 = scmp.ne.s32.totalorder %s180, %s182
      %p186 = scmp.eq.s32.totalorder %s27, 0
      %p187 = por %p185, %p186
      %p188 = scmp.ne.s32.totalorder %s180, %s182
      %p189 = scmp.eq.s32.totalorder %s32, 1
      %p190 = por %p188, %p189
      %p191 = scmp.ne.s32.totalorder %s182, %s183
      %p192 = scmp.eq.s32.totalorder %s32, 0
      %p193 = por %p191, %p192
      %p194 = scmp.ne.s32.totalorder %s182, %s183
      %p195 = scmp.eq.s32.totalorder %s33, 1
      %p196 = por %p194, %p195
      %p198 = scmp.ne.s32.totalorder %s183, %s197
      %p199 = scmp.eq.s32.totalorder %s33, 0
      %p200 = por %p198, %p199
      %s201 = ssub.s32 %s35, %s42
      %s202 = ssub.s32 %s34, %s46
      %s203 = sor.u32 %s201, %s202
      %p204 = scmp.eq.s32.totalorder %s203, 0
      %s206 = sadd.s32 %s205, 1
      %s207 = scalar_select %p204, %s205, %s206
      %p210 = pneg %p204
      %p211 = scmp.eq.s32.totalorder %s27, 1
      %p212 = por %p210, %p211
      %p213 = scmp.ne.s32.totalorder %s205, %s208
      %p214 = scmp.eq.s32.totalorder %s27, 0
      %p215 = por %p213, %p214
      %p216 = scmp.ne.s32.totalorder %s205, %s208
      %p217 = scmp.eq.s32.totalorder %s32, 1
      %p218 = por %p216, %p217
      %p219 = scmp.ne.s32.totalorder %s208, %s209
      %p220 = scmp.eq.s32.totalorder %s32, 0
      %p221 = por %p219, %p220
      %p222 = scmp.ne.s32.totalorder %s208, %s209
      %p223 = scmp.eq.s32.totalorder %s33, 1
      %p224 = por %p222, %p223
      %p226 = scmp.ne.s32.totalorder %s209, %s225
      %p227 = scmp.eq.s32.totalorder %s33, 0
      %p228 = por %p226, %p227
      %s229 = ssub.s32 %s35, %s42
      %s230 = ssub.s32 %s34, %s46
      %s231 = sor.u32 %s229, %s230
      %p232 = scmp.eq.s32.totalorder %s231, 0
      %s234 = sadd.s32 %s233, 1
      %s235 = scalar_select %p232, %s233, %s234
      %p238 = pneg %p232
      %p239 = scmp.eq.s32.totalorder %s27, 1
      %p240 = por %p238, %p239
      %p241 = scmp.ne.s32.totalorder %s233, %s236
      %p242 = scmp.eq.s32.totalorder %s27, 0
      %p243 = por %p241, %p242
      %p244 = scmp.ne.s32.totalorder %s233, %s236
      %p245 = scmp.eq.s32.totalorder %s32, 1
      %p246 = por %p244, %p245
      %p247 = scmp.ne.s32.totalorder %s236, %s237
      %p248 = scmp.eq.s32.totalorder %s32, 0
      %p249 = por %p247, %p248
      %p250 = scmp.ne.s32.totalorder %s236, %s237
      %p251 = scmp.eq.s32.totalorder %s33, 1
      %p252 = por %p250, %p251
      %p254 = scmp.ne.s32.totalorder %s237, %s253
      %p255 = scmp.eq.s32.totalorder %s33, 0
      %p256 = por %p254, %p255
      %p257 = scmp.le.s32.totalorder 1, %s27
      %p258 = scmp.lt.s32.totalorder %s27, 3
      %p259 = pnand %p257, %p258
      %p260 = pneg %p259
      // Predicated region
      $region9: #{tpu_custom_call.1} parent=5 // pred_check
        _
      $region10: #{tpu_custom_call.1} parent=5 // pred_check_branch
        %262 = sbr.rel (%p259) target = $region12
      $region11: #{tpu_custom_call.1} parent=5 // pred_region
        %s263 = ssub.s32 %s27, 1
        // Predicated region
        $region13: #{tpu_custom_call.1} parent=11 // pred_check
          %p264 = pneg %p88
        $region14: #{tpu_custom_call.1} parent=11 // pred_check_branch
          %266 = sbr.rel (%p264) target = $region16
        $region15: #{tpu_custom_call.1} parent=11 // pred_region
          %s268 = ssub.s32 128, 128
          %269 = vsyncadd [#allocation10], %s268
          %s270 = sshll.u32 [#allocation9], 4
          %s271 = int_to_ptr.vmem [resolvable:$true] %s270
          %276 = dma.hbm_to_vmem [thread:$0]  %s1, 128, %s271, [#allocation10], 64, 64, 4
        $region16: #{tpu_custom_call.1} parent=11 // pred_fallthru
          _
        // Predicated region
        $region17: #{tpu_custom_call.1} parent=11 // pred_check
          %p277 = pneg %p109
        $region18: #{tpu_custom_call.1} parent=11 // pred_check_branch
          %279 = sbr.rel (%p277) target = $region20
        $region19: #{tpu_custom_call.1} parent=11 // pred_region
          %s281 = ssub.s32 1024, 1024
          %282 = vsyncadd [#allocation10], %s281
          %s283 = sshll.u32 [#allocation11], 4
          %s284 = int_to_ptr.vmem [resolvable:$true] %s283
          %289 = dma.hbm_to_vmem [thread:$0]  %s2, 1024, %s284, [#allocation10], 64, 64, 4
        $region20: #{tpu_custom_call.1} parent=11 // pred_fallthru
          _
        // Predicated region
        $region21: #{tpu_custom_call.1} parent=11 // pred_check
          %p290 = pneg %p130
        $region22: #{tpu_custom_call.1} parent=11 // pred_check_branch
          %292 = sbr.rel (%p290) target = $region24
        $region23: #{tpu_custom_call.1} parent=11 // pred_region
          %s294 = ssub.s32 1024, 1024
          %295 = vsyncadd [#allocation13], %s294
          %s296 = sshll.u32 [#allocation12], 4
          %s297 = int_to_ptr.vmem [resolvable:$true] %s296
          %302 = dma.hbm_to_vmem [thread:$0]  %s3, 1024, %s297, [#allocation13], 64, 64, 4
        $region24: #{tpu_custom_call.1} parent=11 // pred_fallthru
          _
        // Predicated region
        $region25: #{tpu_custom_call.1} parent=11 // pred_check
          %p303 = pneg %p151
        $region26: #{tpu_custom_call.1} parent=11 // pred_check_branch
          %305 = sbr.rel (%p303) target = $region28
        $region27: #{tpu_custom_call.1} parent=11 // pred_region
          %s307 = ssub.s32 16, 16
          %308 = vsyncadd [#allocation13], %s307
          %s310 = sshll.u32 [#allocation14], 4
          %s311 = int_to_ptr.vmem [resolvable:$true] %s310
          %313 = dma.hbm_to_vmem [thread:$0]  %s4, 16, %s311, [#allocation13]
        $region28: #{tpu_custom_call.1} parent=11 // pred_fallthru
          _
        // Predicated region
        $region29: #{tpu_custom_call.1} parent=11 // pred_check
          %p314 = pneg %p172
        $region30: #{tpu_custom_call.1} parent=11 // pred_check_branch
          %316 = sbr.rel (%p314) target = $region32
        $region31: #{tpu_custom_call.1} parent=11 // pred_region
          %s318 = ssub.s32 16, 16
          %319 = vsyncadd [#allocation16], %s318
          %s321 = sshll.u32 [#allocation15], 4
          %s322 = int_to_ptr.vmem [resolvable:$true] %s321
          %324 = dma.hbm_to_vmem [thread:$0]  %s5, 16, %s322, [#allocation16]
        $region32: #{tpu_custom_call.1} parent=11 // pred_fallthru
          _
        // Predicated region
        $region33: #{tpu_custom_call.1} parent=11 // pred_check
          %p325 = pneg %p193
        $region34: #{tpu_custom_call.1} parent=11 // pred_check_branch
          %327 = sbr.rel (%p325) target = $region36
        $region35: #{tpu_custom_call.1} parent=11 // pred_region
          %s329 = ssub.s32 16, 16
          %330 = vsyncadd [#allocation16], %s329
          %s332 = sshll.u32 [#allocation17], 4
          %s333 = int_to_ptr.vmem [resolvable:$true] %s332
          %335 = dma.hbm_to_vmem [thread:$0]  %s6, 16, %s333, [#allocation16]
        $region36: #{tpu_custom_call.1} parent=11 // pred_fallthru
          _
      $region12: #{tpu_custom_call.1} parent=5 // pred_fallthru
        _
      %p336 = scmp.lt.s32.totalorder %s27, 2
      // Predicated region
      $region37: #{tpu_custom_call.1} parent=5 // pred_check
        %p337 = pneg %p336
      $region38: #{tpu_custom_call.1} parent=5 // pred_check_branch
        %339 = sbr.rel (%p337) target = $region40
      $region39: #{tpu_custom_call.1} parent=5 // pred_region
        // Predicated region
        $region41: #{tpu_custom_call.1} parent=39 // pred_check
          %p340 = pneg %p61
        $region42: #{tpu_custom_call.1} parent=39 // pred_check_branch
          %342 = sbr.rel (%p340) target = $region44
        $region43: #{tpu_custom_call.1} parent=39 // pred_region
          %s343 = sand.u32 %s51, 1
          %s344 = scalar_lea.sflag [#allocation7], %s343
          %s345 = sand.u32 %s51, 1
          %s346 = smul.addr %s345, 32
          %s347 = scalar_lea.vmem [#allocation6], %s346
          %s348 = smul.u32 4, %s35
          %s350 = ssub.s32 512, 512
          %351 = vsyncadd %s344, %s350
          %s352 = sadd.s32 %s34, %s348
          %s353 = smul.addr %s352, 128
          %s354 = scalar_lea.hbm %s0, %s353
          %s355 = sshll.u32 %s347, 4
          %s356 = int_to_ptr.vmem [resolvable:$true] %s355
          %361 = dma.hbm_to_vmem [thread:$0]  %s354, 512, %s356, %s344, 128, 128, 8
        $region44: #{tpu_custom_call.1} parent=39 // pred_fallthru
          _
      $region40: #{tpu_custom_call.1} parent=5 // pred_fallthru
        _
      %p362 = scmp.le.s32.totalorder 1, %s27
      %p363 = scmp.lt.s32.totalorder %s27, 3
      %p364 = pnand %p362, %p363
      %p365 = pneg %p364
      // Predicated region
      $region45: #{tpu_custom_call.1} parent=5 // pred_check
        _
      $region46: #{tpu_custom_call.1} parent=5 // pred_check_branch
        %367 = sbr.rel (%p364) target = $region48
      $region47: #{tpu_custom_call.1} parent=5 // pred_region
        %s368 = ssub.s32 %s27, 1
        %s369 = sand.u32 %s54, 1
        %s370 = scalar_lea.sflag [#allocation7], %s369
        %s371 = sand.u32 %s54, 1
        %s372 = smul.addr %s371, 32
        %s373 = scalar_lea.vmem [#allocation6], %s372
        // Predicated region
        $region49: #{tpu_custom_call.1} parent=47 // pred_check
          %p374 = pneg %p67
        $region50: #{tpu_custom_call.1} parent=47 // pred_check_branch
          %376 = sbr.rel (%p374) target = $region52
        $region51: #{tpu_custom_call.1} parent=47 // pred_region
          %377 = dma.done %s370, 512
        $region52: #{tpu_custom_call.1} parent=47 // pred_fallthru
          _
        // Predicated region
        $region53: #{tpu_custom_call.1} parent=47 // pred_check
          %p378 = pneg %p88
        $region54: #{tpu_custom_call.1} parent=47 // pred_check_branch
          %380 = sbr.rel (%p378) target = $region56
        $region55: #{tpu_custom_call.1} parent=47 // pred_region
          %381 = dma.done [#allocation10], 128
        $region56: #{tpu_custom_call.1} parent=47 // pred_fallthru
          _
        // Predicated region
        $region57: #{tpu_custom_call.1} parent=47 // pred_check
          %p382 = pneg %p109
        $region58: #{tpu_custom_call.1} parent=47 // pred_check_branch
          %384 = sbr.rel (%p382) target = $region60
        $region59: #{tpu_custom_call.1} parent=47 // pred_region
          %385 = dma.done [#allocation10], 1024
        $region60: #{tpu_custom_call.1} parent=47 // pred_fallthru
          _
        // Predicated region
        $region61: #{tpu_custom_call.1} parent=47 // pred_check
          %p386 = pneg %p130
        $region62: #{tpu_custom_call.1} parent=47 // pred_check_branch
          %388 = sbr.rel (%p386) target = $region64
        $region63: #{tpu_custom_call.1} parent=47 // pred_region
          %389 = dma.done [#allocation13], 1024
        $region64: #{tpu_custom_call.1} parent=47 // pred_fallthru
          _
        // Predicated region
        $region65: #{tpu_custom_call.1} parent=47 // pred_check
          %p390 = pneg %p151
        $region66: #{tpu_custom_call.1} parent=47 // pred_check_branch
          %392 = sbr.rel (%p390) target = $region68
        $region67: #{tpu_custom_call.1} parent=47 // pred_region
          %393 = dma.done [#allocation13], 16
        $region68: #{tpu_custom_call.1} parent=47 // pred_fallthru
          _
        // Predicated region
        $region69: #{tpu_custom_call.1} parent=47 // pred_check
          %p394 = pneg %p172
        $region70: #{tpu_custom_call.1} parent=47 // pred_check_branch
          %396 = sbr.rel (%p394) target = $region72
        $region71: #{tpu_custom_call.1} parent=47 // pred_region
          %397 = dma.done [#allocation16], 16
        $region72: #{tpu_custom_call.1} parent=47 // pred_fallthru
          _
        // Predicated region
        $region73: #{tpu_custom_call.1} parent=47 // pred_check
          %p398 = pneg %p193
        $region74: #{tpu_custom_call.1} parent=47 // pred_check_branch
          %400 = sbr.rel (%p398) target = $region76
        $region75: #{tpu_custom_call.1} parent=47 // pred_region
          %401 = dma.done [#allocation16], 16
        $region76: #{tpu_custom_call.1} parent=47 // pred_fallthru
          _
        %s402 = sand.u32 %s54, 1
        %s403 = scalar_lea.sflag [#allocation7], %s402
        %s404 = sand.u32 %s54, 1
        %s405 = smul.addr %s404, 32
        %s406 = scalar_lea.vmem [#allocation6], %s405
        %p407 = pneg %p67
        %p408 = pneg %p64
        %p409 = pneg %p88
        %p410 = pneg %p85
        %p411 = pneg %p109
        %p412 = pneg %p106
        %p413 = pneg %p130
        %p414 = pneg %p127
        %p415 = pneg %p151
        %p416 = pneg %p148
        %p417 = pneg %p172
        %p418 = pneg %p169
        %p419 = pneg %p193
        %p420 = pneg %p190
        %p421 = pneg %p221
        %p422 = pneg %p218
        %s423 = sand.u32 %s208, 1
        %s424 = scalar_lea.sflag [#allocation8], %s423
        %s425 = sand.u32 %s208, 1
        %s426 = smul.addr %s425, 32
        %s427 = scalar_lea.vmem [#allocation18], %s426
        %p428 = pneg %p249
        %p429 = pneg %p246
        %s430 = sand.u32 %s236, 1
        %s431 = scalar_lea.sflag [#allocation20], %s430
        %s432 = sand.u32 %s236, 1
        %s433 = smul.addr %s432, 32
        %s434 = scalar_lea.vmem [#allocation19], %s433
        %s435 = smul.u32 4, %s37
        %s436 = smul.u32 4, %s37
        %s437 = smul.u32 4, %s37
        %p439 = scmp.eq.s32.totalorder %s37, 0
        // Predicated region
        $region77: #{tpu_custom_call.1} parent=47 // pred_check
          %p440 = pneg %p439
        $region78: #{tpu_custom_call.1} parent=47 // pred_check_branch
          %442 = sbr.rel (%p440) target = $region80
        $region79: #{tpu_custom_call.1} parent=47 // pred_region
          %443 = vst [vmem:[#allocation3] sm:$0xff] 0.0
          %444 = vst [vmem:[#allocation4] sm:$0xff] 0.0
          %445 = vst [vmem:[#allocation5] sm:$0xff] 0.0
        $region80: #{tpu_custom_call.1} parent=47 // pred_fallthru
          _
        %v446 = vld [vmem:[%s373] sm:$0xff]
        %v447 = vld [vmem:[%s373 + $0x8] sm:$0xff]
        %v448 = vld [vmem:[%s373 + $0x10] sm:$0xff]
        %v449 = vld [vmem:[%s373 + $0x18] sm:$0xff]
        %v450 = vpack.c.bf16 %v447, %v446
        %v451 = vpack.c.bf16 %v449, %v448
        %v452 = vld [vmem:[#allocation9] sm:$0xf]
        %v453 = vld [vmem:[#allocation9 + $0x4] sm:$0xf]
        %v456 = vunpack.c.l.b16 %v452
        %v457 = vunpack.c.l.b16 %v453
        %v458 = vpack.c.b16 %v457, %v456
        %vm460 = vcmask 130048
        %v462 = vsel %vm460, %v450, 0
        %v465 = vsel %vm460, %v451, 0
        %467 = vmatprep.subr.bf16.mxu0 0
        %468 = vmatpush1.bf16.msra.mxu0 %v458
        %469 = vmatprep.subr.bf16.mxu0 0
        %470 = vmatpush1.bf16.msra.mxu0 0
        %471 = vmatprep.subr.bf16.mxu0 0
        %472 = vmatpush1.bf16.msra.mxu0 0
        %473 = vmatprep.subr.bf16.mxu0 0
        %474 = vmatpush1.bf16.msra.mxu0 0
        %475 = vmatprep.subr.bf16.mxu0 0
        %476 = vmatpush1.bf16.msra.mxu0 0
        %477 = vmatprep.subr.bf16.mxu0 0
        %478 = vmatpush1.bf16.msra.mxu0 0
        %479 = vmatprep.subr.bf16.mxu0 0
        %480 = vmatpush1.bf16.msra.mxu0 0
        %481 = vmatprep.subr.bf16.mxu0 0
        %482 = vmatpush1.bf16.msra.mxu0 0
        %483 = vmatprep.subr.bf16.mxu0 0
        %484 = vmatpush1.bf16.msra.mxu0 0
        %485 = vmatprep.subr.bf16.mxu0 0
        %486 = vmatpush1.bf16.msra.mxu0 0
        %487 = vmatprep.subr.bf16.mxu0 0
        %488 = vmatpush1.bf16.msra.mxu0 0
        %489 = vmatprep.subr.bf16.mxu0 0
        %490 = vmatpush1.bf16.msra.mxu0 0
        %491 = vmatprep.subr.bf16.mxu0 0
        %492 = vmatpush1.bf16.msra.mxu0 0
        %493 = vmatprep.subr.bf16.mxu0 0
        %494 = vmatpush1.bf16.msra.mxu0 0
        %495 = vmatprep.subr.bf16.mxu0 0
        %496 = vmatpush1.bf16.msra.mxu0 0
        %497 = vmatprep.subr.bf16.mxu0 0
        %498 = vmatpush1.bf16.msra.mxu0 0
        %499 = vmatprep.mubr.bf16.mxu0 0
        %500 = vmatmul.mubr.bf16.gmra.mrb[0].mxu0 %v462
        %v501 = vpop.f32.mrb[0].mxu0
        %v502 = vadd.f32 0.0, %v501
        %v503 = vpop.f32.mrb[0].mxu0
        %v504 = vpop.f32.mrb[0].mxu0
        %v505 = vadd.f32 0.0, %v504
        %v506 = vpop.f32.mrb[0].mxu0
        %507 = vmatprep.mubr.bf16.mxu0 0
        %508 = vmatmul.mubr.bf16.gmra.mrb[0].mxu0 %v465
        %v509 = vpop.f32.mrb[0].mxu0
        %v510 = vadd.f32 0.0, %v509
        %v511 = vpop.f32.mrb[0].mxu0
        %v512 = vpop.f32.mrb[0].mxu0
        %v513 = vadd.f32 0.0, %v512
        %v514 = vpop.f32.mrb[0].mxu0
        %515 = vdwg.mxu0
        %516 = vst [vmem:[#allocation2] sm:$0xff] %v502
        %517 = vst [vmem:[#allocation2 + $0x8] sm:$0xff] %v505
        %518 = vst [vmem:[#allocation2 + $0x10] sm:$0xff] %v510
        %519 = vst [vmem:[#allocation2 + $0x18] sm:$0xff] %v513
        %v520 = vld [vmem:[#allocation14] sm:$0x1]
        %v522 = vlaneseq
        %v523 = vshrl.u32 %v522, 7
        %v524 = vsub.s32 0, %v523
        %v525 = vrot.slane %v520, %v524
        %v527 = vld [vmem:[#allocation15] sm:$0x1]
        %v529 = vlaneseq
        %v530 = vshrl.u32 %v529, 7
        %v531 = vsub.s32 0, %v530
        %v532 = vrot.slane %v527, %v531
        %v534 = vld [vmem:[#allocation17] sm:$0x1]
        %v536 = vlaneseq
        %v537 = vshrl.u32 %v536, 7
        %v538 = vsub.s32 0, %v537
        %v539 = vrot.slane %v534, %v538
        %v541 = vld [vmem:[#allocation3] sm:$0xff]
        %v542 = vld [vmem:[#allocation4] sm:$0xff]
        %v543 = vld [vmem:[#allocation5] sm:$0xff]
        %v544 = vld [vmem:[#allocation2] sm:$0xff]
        %v545 = vmul.f32 %v541, %v525
        %v546 = vadd.f32 %v545, %v544
        %vm547 = vcmp.gt.f32.partialorder %v546, 0.3
        %v548 = vsel %vm547, 1, 0
        %v549 = vcvt.s32.f32 %v548
        %v550 = vpack.c.bf16 %v549, %v549
        %vm551 = vcmp.lt.f32.partialorder %v546, 0.3
        %v552 = vsel %vm551, %v546, 0.0
        %v553 = vld [vmem:[#allocation11] sm:$0xf]
        %v554 = vld [vmem:[#allocation11 + $0x4] sm:$0xf]
        %v555 = vld [vmem:[#allocation11 + $0x8] sm:$0xf]
        %v556 = vld [vmem:[#allocation11 + $0xc] sm:$0xf]
        %v557 = vld [vmem:[#allocation11 + $0x10] sm:$0xf]
        %v558 = vld [vmem:[#allocation11 + $0x14] sm:$0xf]
        %v559 = vld [vmem:[#allocation11 + $0x18] sm:$0xf]
        %v560 = vld [vmem:[#allocation11 + $0x1c] sm:$0xf]
        %v561 = vld [vmem:[#allocation11 + $0x20] sm:$0xf]
        %v562 = vld [vmem:[#allocation11 + $0x24] sm:$0xf]
        %v563 = vld [vmem:[#allocation11 + $0x28] sm:$0xf]
        %v564 = vld [vmem:[#allocation11 + $0x2c] sm:$0xf]
        %v565 = vld [vmem:[#allocation11 + $0x30] sm:$0xf]
        %v566 = vld [vmem:[#allocation11 + $0x34] sm:$0xf]
        %v567 = vld [vmem:[#allocation11 + $0x38] sm:$0xf]
        %v568 = vld [vmem:[#allocation11 + $0x3c] sm:$0xf]
        %v585 = vunpack.c.l.b16 %v553
        %v586 = vunpack.c.l.b16 %v554
        %v587 = vunpack.c.l.b16 %v555
        %v588 = vunpack.c.l.b16 %v556
        %v589 = vunpack.c.l.b16 %v557
        %v590 = vunpack.c.l.b16 %v558
        %v591 = vunpack.c.l.b16 %v559
        %v592 = vunpack.c.l.b16 %v560
        %v593 = vunpack.c.l.b16 %v561
        %v594 = vunpack.c.l.b16 %v562
        %v595 = vunpack.c.l.b16 %v563
        %v596 = vunpack.c.l.b16 %v564
        %v597 = vunpack.c.l.b16 %v565
        %v598 = vunpack.c.l.b16 %v566
        %v599 = vunpack.c.l.b16 %v567
        %v600 = vunpack.c.l.b16 %v568
        %v601 = vpack.c.b16 %v586, %v585
        %v602 = vpack.c.b16 %v588, %v587
        %v603 = vpack.c.b16 %v590, %v589
        %v604 = vpack.c.b16 %v592, %v591
        %v605 = vpack.c.b16 %v594, %v593
        %v606 = vpack.c.b16 %v596, %v595
        %v607 = vpack.c.b16 %v598, %v597
        %v608 = vpack.c.b16 %v600, %v599
        %617 = vmatprep.subr.bf16.mxu0 0
        %618 = vmatpush1.bf16.msra.mxu0 %v601
        %619 = vmatprep.subr.bf16.mxu0 0
        %620 = vmatpush1.bf16.msra.mxu0 %v602
        %621 = vmatprep.subr.bf16.mxu0 0
        %622 = vmatpush1.bf16.msra.mxu0 %v603
        %623 = vmatprep.subr.bf16.mxu0 0
        %624 = vmatpush1.bf16.msra.mxu0 %v604
        %625 = vmatprep.subr.bf16.mxu0 0
        %626 = vmatpush1.bf16.msra.mxu0 %v605
        %627 = vmatprep.subr.bf16.mxu0 0
        %628 = vmatpush1.bf16.msra.mxu0 %v606
        %629 = vmatprep.subr.bf16.mxu0 0
        %630 = vmatpush1.bf16.msra.mxu0 %v607
        %631 = vmatprep.subr.bf16.mxu0 0
        %632 = vmatpush1.bf16.msra.mxu0 %v608
        %633 = vmatprep.subr.bf16.mxu0 0
        %634 = vmatpush1.bf16.msra.mxu0 0
        %635 = vmatprep.subr.bf16.mxu0 0
        %636 = vmatpush1.bf16.msra.mxu0 0
        %637 = vmatprep.subr.bf16.mxu0 0
        %638 = vmatpush1.bf16.msra.mxu0 0
        %639 = vmatprep.subr.bf16.mxu0 0
        %640 = vmatpush1.bf16.msra.mxu0 0
        %641 = vmatprep.subr.bf16.mxu0 0
        %642 = vmatpush1.bf16.msra.mxu0 0
        %643 = vmatprep.subr.bf16.mxu0 0
        %644 = vmatpush1.bf16.msra.mxu0 0
        %645 = vmatprep.subr.bf16.mxu0 0
        %646 = vmatpush1.bf16.msra.mxu0 0
        %647 = vmatprep.subr.bf16.mxu0 0
        %648 = vmatpush1.bf16.msra.mxu0 0
        %649 = vmatprep.mubr.bf16.mxu0 0
        %650 = vmatmul.mubr.bf16.gmra.mrb[0].mxu0 %v550
        %v651 = vpop.f32.mrb[0].mxu0
        %v652 = vadd.f32 0.0, %v651
        %v653 = vpop.f32.mrb[0].mxu0
        %v654 = vpop.f32.mrb[0].mxu0
        %v655 = vpop.f32.mrb[0].mxu0
        %656 = vdwg.mxu0
        %v657 = vmul.f32 %v542, %v532
        %v658 = vadd.f32 %v657, %v652
        %vm659 = vcmp.gt.f32.partialorder %v658, 0.3
        %v660 = vsel %vm659, 1, 0
        %v661 = vcvt.s32.f32 %v660
        %v662 = vpack.c.bf16 %v661, %v661
        %vm663 = vcmp.lt.f32.partialorder %v658, 0.3
        %v664 = vsel %vm663, %v658, 0.0
        %v665 = vld [vmem:[#allocation12] sm:$0xf]
        %v666 = vld [vmem:[#allocation12 + $0x4] sm:$0xf]
        %v667 = vld [vmem:[#allocation12 + $0x8] sm:$0xf]
        %v668 = vld [vmem:[#allocation12 + $0xc] sm:$0xf]
        %v669 = vld [vmem:[#allocation12 + $0x10] sm:$0xf]
        %v670 = vld [vmem:[#allocation12 + $0x14] sm:$0xf]
        %v671 = vld [vmem:[#allocation12 + $0x18] sm:$0xf]
        %v672 = vld [vmem:[#allocation12 + $0x1c] sm:$0xf]
        %v673 = vld [vmem:[#allocation12 + $0x20] sm:$0xf]
        %v674 = vld [vmem:[#allocation12 + $0x24] sm:$0xf]
        %v675 = vld [vmem:[#allocation12 + $0x28] sm:$0xf]
        %v676 = vld [vmem:[#allocation12 + $0x2c] sm:$0xf]
        %v677 = vld [vmem:[#allocation12 + $0x30] sm:$0xf]
        %v678 = vld [vmem:[#allocation12 + $0x34] sm:$0xf]
        %v679 = vld [vmem:[#allocation12 + $0x38] sm:$0xf]
        %v680 = vld [vmem:[#allocation12 + $0x3c] sm:$0xf]
        %v697 = vunpack.c.l.b16 %v665
        %v698 = vunpack.c.l.b16 %v666
        %v699 = vunpack.c.l.b16 %v667
        %v700 = vunpack.c.l.b16 %v668
        %v701 = vunpack.c.l.b16 %v669
        %v702 = vunpack.c.l.b16 %v670
        %v703 = vunpack.c.l.b16 %v671
        %v704 = vunpack.c.l.b16 %v672
        %v705 = vunpack.c.l.b16 %v673
        %v706 = vunpack.c.l.b16 %v674
        %v707 = vunpack.c.l.b16 %v675
        %v708 = vunpack.c.l.b16 %v676
        %v709 = vunpack.c.l.b16 %v677
        %v710 = vunpack.c.l.b16 %v678
        %v711 = vunpack.c.l.b16 %v679
        %v712 = vunpack.c.l.b16 %v680
        %v713 = vpack.c.b16 %v698, %v697
        %v714 = vpack.c.b16 %v700, %v699
        %v715 = vpack.c.b16 %v702, %v701
        %v716 = vpack.c.b16 %v704, %v703
        %v717 = vpack.c.b16 %v706, %v705
        %v718 = vpack.c.b16 %v708, %v707
        %v719 = vpack.c.b16 %v710, %v709
        %v720 = vpack.c.b16 %v712, %v711
        %729 = vmatprep.subr.bf16.mxu0 0
        %730 = vmatpush1.bf16.msra.mxu0 %v713
        %731 = vmatprep.subr.bf16.mxu0 0
        %732 = vmatpush1.bf16.msra.mxu0 %v714
        %733 = vmatprep.subr.bf16.mxu0 0
        %734 = vmatpush1.bf16.msra.mxu0 %v715
        %735 = vmatprep.subr.bf16.mxu0 0
        %736 = vmatpush1.bf16.msra.mxu0 %v716
        %737 = vmatprep.subr.bf16.mxu0 0
        %738 = vmatpush1.bf16.msra.mxu0 %v717
        %739 = vmatprep.subr.bf16.mxu0 0
        %740 = vmatpush1.bf16.msra.mxu0 %v718
        %741 = vmatprep.subr.bf16.mxu0 0
        %742 = vmatpush1.bf16.msra.mxu0 %v719
        %743 = vmatprep.subr.bf16.mxu0 0
        %744 = vmatpush1.bf16.msra.mxu0 %v720
        %745 = vmatprep.subr.bf16.mxu0 0
        %746 = vmatpush1.bf16.msra.mxu0 0
        %747 = vmatprep.subr.bf16.mxu0 0
        %748 = vmatpush1.bf16.msra.mxu0 0
        %749 = vmatprep.subr.bf16.mxu0 0
        %750 = vmatpush1.bf16.msra.mxu0 0
        %751 = vmatprep.subr.bf16.mxu0 0
        %752 = vmatpush1.bf16.msra.mxu0 0
        %753 = vmatprep.subr.bf16.mxu0 0
        %754 = vmatpush1.bf16.msra.mxu0 0
        %755 = vmatprep.subr.bf16.mxu0 0
        %756 = vmatpush1.bf16.msra.mxu0 0
        %757 = vmatprep.subr.bf16.mxu0 0
        %758 = vmatpush1.bf16.msra.mxu0 0
        %759 = vmatprep.subr.bf16.mxu0 0
        %760 = vmatpush1.bf16.msra.mxu0 0
        %761 = vmatprep.mubr.bf16.mxu0 0
        %762 = vmatmul.mubr.bf16.gmra.mrb[0].mxu0 %v662
        %v763 = vpop.f32.mrb[0].mxu0
        %v764 = vadd.f32 0.0, %v763
        %v765 = vpop.f32.mrb[0].mxu0
        %v766 = vpop.f32.mrb[0].mxu0
        %v767 = vpop.f32.mrb[0].mxu0
        %768 = vdwg.mxu0
        %v769 = vmul.f32 %v543, %v539
        %v770 = vadd.f32 %v769, %v764
        %vm771 = vcmp.gt.f32.partialorder %v770, 1000000.0
        %v772 = vsel %vm771, 1, 0
        %v773 = vcvt.s32.f32 %v772
        %vm774 = vcmp.lt.f32.partialorder %v770, 1000000.0
        %v775 = vsel %vm774, %v770, 0.0
        %776 = vst [vmem:[%s427] sm:$0xff] %v775
        %777 = vst [vmem:[%s434] sm:$0xff] %v773
        %s778 = scalar_lea.vmem [#allocation2], 8
        %v779 = vld [vmem:[%s778] sm:$0xff]
        %v780 = vmul.f32 %v552, %v525
        %v781 = vadd.f32 %v780, %v779
        %vm782 = vcmp.gt.f32.partialorder %v781, 0.3
        %v783 = vsel %vm782, 1, 0
        %v784 = vcvt.s32.f32 %v783
        %v785 = vpack.c.bf16 %v784, %v784
        %vm786 = vcmp.lt.f32.partialorder %v781, 0.3
        %v787 = vsel %vm786, %v781, 0.0
        %v788 = vld [vmem:[#allocation11] sm:$0xf]
        %v789 = vld [vmem:[#allocation11 + $0x4] sm:$0xf]
        %v790 = vld [vmem:[#allocation11 + $0x8] sm:$0xf]
        %v791 = vld [vmem:[#allocation11 + $0xc] sm:$0xf]
        %v792 = vld [vmem:[#allocation11 + $0x10] sm:$0xf]
        %v793 = vld [vmem:[#allocation11 + $0x14] sm:$0xf]
        %v794 = vld [vmem:[#allocation11 + $0x18] sm:$0xf]
        %v795 = vld [vmem:[#allocation11 + $0x1c] sm:$0xf]
        %v796 = vld [vmem:[#allocation11 + $0x20] sm:$0xf]
        %v797 = vld [vmem:[#allocation11 + $0x24] sm:$0xf]
        %v798 = vld [vmem:[#allocation11 + $0x28] sm:$0xf]
        %v799 = vld [vmem:[#allocation11 + $0x2c] sm:$0xf]
        %v800 = vld [vmem:[#allocation11 + $0x30] sm:$0xf]
        %v801 = vld [vmem:[#allocation11 + $0x34] sm:$0xf]
        %v802 = vld [vmem:[#allocation11 + $0x38] sm:$0xf]
        %v803 = vld [vmem:[#allocation11 + $0x3c] sm:$0xf]
        %v820 = vunpack.c.l.b16 %v788
        %v821 = vunpack.c.l.b16 %v789
        %v822 = vunpack.c.l.b16 %v790
        %v823 = vunpack.c.l.b16 %v791
        %v824 = vunpack.c.l.b16 %v792
        %v825 = vunpack.c.l.b16 %v793
        %v826 = vunpack.c.l.b16 %v794
        %v827 = vunpack.c.l.b16 %v795
        %v828 = vunpack.c.l.b16 %v796
        %v829 = vunpack.c.l.b16 %v797
        %v830 = vunpack.c.l.b16 %v798
        %v831 = vunpack.c.l.b16 %v799
        %v832 = vunpack.c.l.b16 %v800
        %v833 = vunpack.c.l.b16 %v801
        %v834 = vunpack.c.l.b16 %v802
        %v835 = vunpack.c.l.b16 %v803
        %v836 = vpack.c.b16 %v821, %v820
        %v837 = vpack.c.b16 %v823, %v822
        %v838 = vpack.c.b16 %v825, %v824
        %v839 = vpack.c.b16 %v827, %v826
        %v840 = vpack.c.b16 %v829, %v828
        %v841 = vpack.c.b16 %v831, %v830
        %v842 = vpack.c.b16 %v833, %v832
        %v843 = vpack.c.b16 %v835, %v834
        %852 = vmatprep.subr.bf16.mxu0 0
        %853 = vmatpush1.bf16.msra.mxu0 %v836
        %854 = vmatprep.subr.bf16.mxu0 0
        %855 = vmatpush1.bf16.msra.mxu0 %v837
        %856 = vmatprep.subr.bf16.mxu0 0
        %857 = vmatpush1.bf16.msra.mxu0 %v838
        %858 = vmatprep.subr.bf16.mxu0 0
        %859 = vmatpush1.bf16.msra.mxu0 %v839
        %860 = vmatprep.subr.bf16.mxu0 0
        %861 = vmatpush1.bf16.msra.mxu0 %v840
        %862 = vmatprep.subr.bf16.mxu0 0
        %863 = vmatpush1.bf16.msra.mxu0 %v841
        %864 = vmatprep.subr.bf16.mxu0 0
        %865 = vmatpush1.bf16.msra.mxu0 %v842
        %866 = vmatprep.subr.bf16.mxu0 0
        %867 = vmatpush1.bf16.msra.mxu0 %v843
        %868 = vmatprep.subr.bf16.mxu0 0
        %869 = vmatpush1.bf16.msra.mxu0 0
        %870 = vmatprep.subr.bf16.mxu0 0
        %871 = vmatpush1.bf16.msra.mxu0 0
        %872 = vmatprep.subr.bf16.mxu0 0
        %873 = vmatpush1.bf16.msra.mxu0 0
        %874 = vmatprep.subr.bf16.mxu0 0
        %875 = vmatpush1.bf16.msra.mxu0 0
        %876 = vmatprep.subr.bf16.mxu0 0
        %877 = vmatpush1.bf16.msra.mxu0 0
        %878 = vmatprep.subr.bf16.mxu0 0
        %879 = vmatpush1.bf16.msra.mxu0 0
        %880 = vmatprep.subr.bf16.mxu0 0
        %881 = vmatpush1.bf16.msra.mxu0 0
        %882 = vmatprep.subr.bf16.mxu0 0
        %883 = vmatpush1.bf16.msra.mxu0 0
        %884 = vmatprep.mubr.bf16.mxu0 0
        %885 = vmatmul.mubr.bf16.gmra.mrb[0].mxu0 %v785
        %v886 = vpop.f32.mrb[0].mxu0
        %v887 = vadd.f32 0.0, %v886
        %v888 = vpop.f32.mrb[0].mxu0
        %v889 = vpop.f32.mrb[0].mxu0
        %v890 = vpop.f32.mrb[0].mxu0
        %891 = vdwg.mxu0
        %v892 = vmul.f32 %v664, %v532
        %v893 = vadd.f32 %v892, %v887
        %vm894 = vcmp.gt.f32.partialorder %v893, 0.3
        %v895 = vsel %vm894, 1, 0
        %v896 = vcvt.s32.f32 %v895
        %v897 = vpack.c.bf16 %v896, %v896
        %vm898 = vcmp.lt.f32.partialorder %v893, 0.3
        %v899 = vsel %vm898, %v893, 0.0
        %v900 = vld [vmem:[#allocation12] sm:$0xf]
        %v901 = vld [vmem:[#allocation12 + $0x4] sm:$0xf]
        %v902 = vld [vmem:[#allocation12 + $0x8] sm:$0xf]
        %v903 = vld [vmem:[#allocation12 + $0xc] sm:$0xf]
        %v904 = vld [vmem:[#allocation12 + $0x10] sm:$0xf]
        %v905 = vld [vmem:[#allocation12 + $0x14] sm:$0xf]
        %v906 = vld [vmem:[#allocation12 + $0x18] sm:$0xf]
        %v907 = vld [vmem:[#allocation12 + $0x1c] sm:$0xf]
        %v908 = vld [vmem:[#allocation12 + $0x20] sm:$0xf]
        %v909 = vld [vmem:[#allocation12 + $0x24] sm:$0xf]
        %v910 = vld [vmem:[#allocation12 + $0x28] sm:$0xf]
        %v911 = vld [vmem:[#allocation12 + $0x2c] sm:$0xf]
        %v912 = vld [vmem:[#allocation12 + $0x30] sm:$0xf]
        %v913 = vld [vmem:[#allocation12 + $0x34] sm:$0xf]
        %v914 = vld [vmem:[#allocation12 + $0x38] sm:$0xf]
        %v915 = vld [vmem:[#allocation12 + $0x3c] sm:$0xf]
        %v932 = vunpack.c.l.b16 %v900
        %v933 = vunpack.c.l.b16 %v901
        %v934 = vunpack.c.l.b16 %v902
        %v935 = vunpack.c.l.b16 %v903
        %v936 = vunpack.c.l.b16 %v904
        %v937 = vunpack.c.l.b16 %v905
        %v938 = vunpack.c.l.b16 %v906
        %v939 = vunpack.c.l.b16 %v907
        %v940 = vunpack.c.l.b16 %v908
        %v941 = vunpack.c.l.b16 %v909
        %v942 = vunpack.c.l.b16 %v910
        %v943 = vunpack.c.l.b16 %v911
        %v944 = vunpack.c.l.b16 %v912
        %v945 = vunpack.c.l.b16 %v913
        %v946 = vunpack.c.l.b16 %v914
        %v947 = vunpack.c.l.b16 %v915
        %v948 = vpack.c.b16 %v933, %v932
        %v949 = vpack.c.b16 %v935, %v934
        %v950 = vpack.c.b16 %v937, %v936
        %v951 = vpack.c.b16 %v939, %v938
        %v952 = vpack.c.b16 %v941, %v940
        %v953 = vpack.c.b16 %v943, %v942
        %v954 = vpack.c.b16 %v945, %v944
        %v955 = vpack.c.b16 %v947, %v946
        %964 = vmatprep.subr.bf16.mxu0 0
        %965 = vmatpush1.bf16.msra.mxu0 %v948
        %966 = vmatprep.subr.bf16.mxu0 0
        %967 = vmatpush1.bf16.msra.mxu0 %v949
        %968 = vmatprep.subr.bf16.mxu0 0
        %969 = vmatpush1.bf16.msra.mxu0 %v950
        %970 = vmatprep.subr.bf16.mxu0 0
        %971 = vmatpush1.bf16.msra.mxu0 %v951
        %972 = vmatprep.subr.bf16.mxu0 0
        %973 = vmatpush1.bf16.msra.mxu0 %v952
        %974 = vmatprep.subr.bf16.mxu0 0
        %975 = vmatpush1.bf16.msra.mxu0 %v953
        %976 = vmatprep.subr.bf16.mxu0 0
        %977 = vmatpush1.bf16.msra.mxu0 %v954
        %978 = vmatprep.subr.bf16.mxu0 0
        %979 = vmatpush1.bf16.msra.mxu0 %v955
        %980 = vmatprep.subr.bf16.mxu0 0
        %981 = vmatpush1.bf16.msra.mxu0 0
        %982 = vmatprep.subr.bf16.mxu0 0
        %983 = vmatpush1.bf16.msra.mxu0 0
        %984 = vmatprep.subr.bf16.mxu0 0
        %985 = vmatpush1.bf16.msra.mxu0 0
        %986 = vmatprep.subr.bf16.mxu0 0
        %987 = vmatpush1.bf16.msra.mxu0 0
        %988 = vmatprep.subr.bf16.mxu0 0
        %989 = vmatpush1.bf16.msra.mxu0 0
        %990 = vmatprep.subr.bf16.mxu0 0
        %991 = vmatpush1.bf16.msra.mxu0 0
        %992 = vmatprep.subr.bf16.mxu0 0
        %993 = vmatpush1.bf16.msra.mxu0 0
        %994 = vmatprep.subr.bf16.mxu0 0
        %995 = vmatpush1.bf16.msra.mxu0 0
        %996 = vmatprep.mubr.bf16.mxu0 0
        %997 = vmatmul.mubr.bf16.gmra.mrb[0].mxu0 %v897
        %v998 = vpop.f32.mrb[0].mxu0
        %v999 = vadd.f32 0.0, %v998
        %v1000 = vpop.f32.mrb[0].mxu0
        %v1001 = vpop.f32.mrb[0].mxu0
        %v1002 = vpop.f32.mrb[0].mxu0
        %1003 = vdwg.mxu0
        %v1004 = vmul.f32 %v775, %v539
        %v1005 = vadd.f32 %v1004, %v999
        %vm1006 = vcmp.gt.f32.partialorder %v1005, 1000000.0
        %v1007 = vsel %vm1006, 1, 0
        %v1008 = vcvt.s32.f32 %v1007
        %vm1009 = vcmp.lt.f32.partialorder %v1005, 1000000.0
        %v1010 = vsel %vm1009, %v1005, 0.0
        %s1011 = scalar_lea.vmem %s427, 8 [#allocation18]
        %1012 = vst [vmem:[%s1011] sm:$0xff] %v1010
        %s1013 = scalar_lea.vmem %s434, 8 [#allocation19]
        %1014 = vst [vmem:[%s1013] sm:$0xff] %v1008
        %s1015 = scalar_lea.vmem [#allocation2], 16
        %v1016 = vld [vmem:[%s1015] sm:$0xff]
        %v1017 = vmul.f32 %v787, %v525
        %v1018 = vadd.f32 %v1017, %v1016
        %vm1019 = vcmp.gt.f32.partialorder %v1018, 0.3
        %v1020 = vsel %vm1019, 1, 0
        %v1021 = vcvt.s32.f32 %v1020
        %v1022 = vpack.c.bf16 %v1021, %v1021
        %vm1023 = vcmp.lt.f32.partialorder %v1018, 0.3
        %v1024 = vsel %vm1023, %v1018, 0.0
        %v1025 = vld [vmem:[#allocation11] sm:$0xf]
        %v1026 = vld [vmem:[#allocation11 + $0x4] sm:$0xf]
        %v1027 = vld [vmem:[#allocation11 + $0x8] sm:$0xf]
        %v1028 = vld [vmem:[#allocation11 + $0xc] sm:$0xf]
        %v1029 = vld [vmem:[#allocation11 + $0x10] sm:$0xf]
        %v1030 = vld [vmem:[#allocation11 + $0x14] sm:$0xf]
        %v1031 = vld [vmem:[#allocation11 + $0x18] sm:$0xf]
        %v1032 = vld [vmem:[#allocation11 + $0x1c] sm:$0xf]
        %v1033 = vld [vmem:[#allocation11 + $0x20] sm:$0xf]
        %v1034 = vld [vmem:[#allocation11 + $0x24] sm:$0xf]
        %v1035 = vld [vmem:[#allocation11 + $0x28] sm:$0xf]
        %v1036 = vld [vmem:[#allocation11 + $0x2c] sm:$0xf]
        %v1037 = vld [vmem:[#allocation11 + $0x30] sm:$0xf]
        %v1038 = vld [vmem:[#allocation11 + $0x34] sm:$0xf]
        %v1039 = vld [vmem:[#allocation11 + $0x38] sm:$0xf]
        %v1040 = vld [vmem:[#allocation11 + $0x3c] sm:$0xf]
        %v1057 = vunpack.c.l.b16 %v1025
        %v1058 = vunpack.c.l.b16 %v1026
        %v1059 = vunpack.c.l.b16 %v1027
        %v1060 = vunpack.c.l.b16 %v1028
        %v1061 = vunpack.c.l.b16 %v1029
        %v1062 = vunpack.c.l.b16 %v1030
        %v1063 = vunpack.c.l.b16 %v1031
        %v1064 = vunpack.c.l.b16 %v1032
        %v1065 = vunpack.c.l.b16 %v1033
        %v1066 = vunpack.c.l.b16 %v1034
        %v1067 = vunpack.c.l.b16 %v1035
        %v1068 = vunpack.c.l.b16 %v1036
        %v1069 = vunpack.c.l.b16 %v1037
        %v1070 = vunpack.c.l.b16 %v1038
        %v1071 = vunpack.c.l.b16 %v1039
        %v1072 = vunpack.c.l.b16 %v1040
        %v1073 = vpack.c.b16 %v1058, %v1057
        %v1074 = vpack.c.b16 %v1060, %v1059
        %v1075 = vpack.c.b16 %v1062, %v1061
        %v1076 = vpack.c.b16 %v1064, %v1063
        %v1077 = vpack.c.b16 %v1066, %v1065
        %v1078 = vpack.c.b16 %v1068, %v1067
        %v1079 = vpack.c.b16 %v1070, %v1069
        %v1080 = vpack.c.b16 %v1072, %v1071
        %1089 = vmatprep.subr.bf16.mxu0 0
        %1090 = vmatpush1.bf16.msra.mxu0 %v1073
        %1091 = vmatprep.subr.bf16.mxu0 0
        %1092 = vmatpush1.bf16.msra.mxu0 %v1074
        %1093 = vmatprep.subr.bf16.mxu0 0
        %1094 = vmatpush1.bf16.msra.mxu0 %v1075
        %1095 = vmatprep.subr.bf16.mxu0 0
        %1096 = vmatpush1.bf16.msra.mxu0 %v1076
        %1097 = vmatprep.subr.bf16.mxu0 0
        %1098 = vmatpush1.bf16.msra.mxu0 %v1077
        %1099 = vmatprep.subr.bf16.mxu0 0
        %1100 = vmatpush1.bf16.msra.mxu0 %v1078
        %1101 = vmatprep.subr.bf16.mxu0 0
        %1102 = vmatpush1.bf16.msra.mxu0 %v1079
        %1103 = vmatprep.subr.bf16.mxu0 0
        %1104 = vmatpush1.bf16.msra.mxu0 %v1080
        %1105 = vmatprep.subr.bf16.mxu0 0
        %1106 = vmatpush1.bf16.msra.mxu0 0
        %1107 = vmatprep.subr.bf16.mxu0 0
        %1108 = vmatpush1.bf16.msra.mxu0 0
        %1109 = vmatprep.subr.bf16.mxu0 0
        %1110 = vmatpush1.bf16.msra.mxu0 0
        %1111 = vmatprep.subr.bf16.mxu0 0
        %1112 = vmatpush1.bf16.msra.mxu0 0
        %1113 = vmatprep.subr.bf16.mxu0 0
        %1114 = vmatpush1.bf16.msra.mxu0 0
        %1115 = vmatprep.subr.bf16.mxu0 0
        %1116 = vmatpush1.bf16.msra.mxu0 0
        %1117 = vmatprep.subr.bf16.mxu0 0
        %1118 = vmatpush1.bf16.msra.mxu0 0
        %1119 = vmatprep.subr.bf16.mxu0 0
        %1120 = vmatpush1.bf16.msra.mxu0 0
        %1121 = vmatprep.mubr.bf16.mxu0 0
        %1122 = vmatmul.mubr.bf16.gmra.mrb[0].mxu0 %v1022
        %v1123 = vpop.f32.mrb[0].mxu0
        %v1124 = vadd.f32 0.0, %v1123
        %v1125 = vpop.f32.mrb[0].mxu0
        %v1126 = vpop.f32.mrb[0].mxu0
        %v1127 = vpop.f32.mrb[0].mxu0
        %1128 = vdwg.mxu0
        %v1129 = vmul.f32 %v899, %v532
        %v1130 = vadd.f32 %v1129, %v1124
        %vm1131 = vcmp.gt.f32.partialorder %v1130, 0.3
        %v1132 = vsel %vm1131, 1, 0
        %v1133 = vcvt.s32.f32 %v1132
        %v1134 = vpack.c.bf16 %v1133, %v1133
        %vm1135 = vcmp.lt.f32.partialorder %v1130, 0.3
        %v1136 = vsel %vm1135, %v1130, 0.0
        %v1137 = vld [vmem:[#allocation12] sm:$0xf]
        %v1138 = vld [vmem:[#allocation12 + $0x4] sm:$0xf]
        %v1139 = vld [vmem:[#allocation12 + $0x8] sm:$0xf]
        %v1140 = vld [vmem:[#allocation12 + $0xc] sm:$0xf]
        %v1141 = vld [vmem:[#allocation12 + $0x10] sm:$0xf]
        %v1142 = vld [vmem:[#allocation12 + $0x14] sm:$0xf]
        %v1143 = vld [vmem:[#allocation12 + $0x18] sm:$0xf]
        %v1144 = vld [vmem:[#allocation12 + $0x1c] sm:$0xf]
        %v1145 = vld [vmem:[#allocation12 + $0x20] sm:$0xf]
        %v1146 = vld [vmem:[#allocation12 + $0x24] sm:$0xf]
        %v1147 = vld [vmem:[#allocation12 + $0x28] sm:$0xf]
        %v1148 = vld [vmem:[#allocation12 + $0x2c] sm:$0xf]
        %v1149 = vld [vmem:[#allocation12 + $0x30] sm:$0xf]
        %v1150 = vld [vmem:[#allocation12 + $0x34] sm:$0xf]
        %v1151 = vld [vmem:[#allocation12 + $0x38] sm:$0xf]
        %v1152 = vld [vmem:[#allocation12 + $0x3c] sm:$0xf]
        %v1169 = vunpack.c.l.b16 %v1137
        %v1170 = vunpack.c.l.b16 %v1138
        %v1171 = vunpack.c.l.b16 %v1139
        %v1172 = vunpack.c.l.b16 %v1140
        %v1173 = vunpack.c.l.b16 %v1141
        %v1174 = vunpack.c.l.b16 %v1142
        %v1175 = vunpack.c.l.b16 %v1143
        %v1176 = vunpack.c.l.b16 %v1144
        %v1177 = vunpack.c.l.b16 %v1145
        %v1178 = vunpack.c.l.b16 %v1146
        %v1179 = vunpack.c.l.b16 %v1147
        %v1180 = vunpack.c.l.b16 %v1148
        %v1181 = vunpack.c.l.b16 %v1149
        %v1182 = vunpack.c.l.b16 %v1150
        %v1183 = vunpack.c.l.b16 %v1151
        %v1184 = vunpack.c.l.b16 %v1152
        %v1185 = vpack.c.b16 %v1170, %v1169
        %v1186 = vpack.c.b16 %v1172, %v1171
        %v1187 = vpack.c.b16 %v1174, %v1173
        %v1188 = vpack.c.b16 %v1176, %v1175
        %v1189 = vpack.c.b16 %v1178, %v1177
        %v1190 = vpack.c.b16 %v1180, %v1179
        %v1191 = vpack.c.b16 %v1182, %v1181
        %v1192 = vpack.c.b16 %v1184, %v1183
        %1201 = vmatprep.subr.bf16.mxu0 0
        %1202 = vmatpush1.bf16.msra.mxu0 %v1185
        %1203 = vmatprep.subr.bf16.mxu0 0
        %1204 = vmatpush1.bf16.msra.mxu0 %v1186
        %1205 = vmatprep.subr.bf16.mxu0 0
        %1206 = vmatpush1.bf16.msra.mxu0 %v1187
        %1207 = vmatprep.subr.bf16.mxu0 0
        %1208 = vmatpush1.bf16.msra.mxu0 %v1188
        %1209 = vmatprep.subr.bf16.mxu0 0
        %1210 = vmatpush1.bf16.msra.mxu0 %v1189
        %1211 = vmatprep.subr.bf16.mxu0 0
        %1212 = vmatpush1.bf16.msra.mxu0 %v1190
        %1213 = vmatprep.subr.bf16.mxu0 0
        %1214 = vmatpush1.bf16.msra.mxu0 %v1191
        %1215 = vmatprep.subr.bf16.mxu0 0
        %1216 = vmatpush1.bf16.msra.mxu0 %v1192
        %1217 = vmatprep.subr.bf16.mxu0 0
        %1218 = vmatpush1.bf16.msra.mxu0 0
        %1219 = vmatprep.subr.bf16.mxu0 0
        %1220 = vmatpush1.bf16.msra.mxu0 0
        %1221 = vmatprep.subr.bf16.mxu0 0
        %1222 = vmatpush1.bf16.msra.mxu0 0
        %1223 = vmatprep.subr.bf16.mxu0 0
        %1224 = vmatpush1.bf16.msra.mxu0 0
        %1225 = vmatprep.subr.bf16.mxu0 0
        %1226 = vmatpush1.bf16.msra.mxu0 0
        %1227 = vmatprep.subr.bf16.mxu0 0
        %1228 = vmatpush1.bf16.msra.mxu0 0
        %1229 = vmatprep.subr.bf16.mxu0 0
        %1230 = vmatpush1.bf16.msra.mxu0 0
        %1231 = vmatprep.subr.bf16.mxu0 0
        %1232 = vmatpush1.bf16.msra.mxu0 0
        %1233 = vmatprep.mubr.bf16.mxu0 0
        %1234 = vmatmul.mubr.bf16.gmra.mrb[0].mxu0 %v1134
        %v1235 = vpop.f32.mrb[0].mxu0
        %v1236 = vadd.f32 0.0, %v1235
        %v1237 = vpop.f32.mrb[0].mxu0
        %v1238 = vpop.f32.mrb[0].mxu0
        %v1239 = vpop.f32.mrb[0].mxu0
        %1240 = vdwg.mxu0
        %v1241 = vmul.f32 %v1010, %v539
        %v1242 = vadd.f32 %v1241, %v1236
        %vm1243 = vcmp.gt.f32.partialorder %v1242, 1000000.0
        %v1244 = vsel %vm1243, 1, 0
        %v1245 = vcvt.s32.f32 %v1244
        %vm1246 = vcmp.lt.f32.partialorder %v1242, 1000000.0
        %v1247 = vsel %vm1246, %v1242, 0.0
        %s1248 = scalar_lea.vmem %s427, 16 [#allocation18]
        %1249 = vst [vmem:[%s1248] sm:$0xff] %v1247
        %s1250 = scalar_lea.vmem %s434, 16 [#allocation19]
        %1251 = vst [vmem:[%s1250] sm:$0xff] %v1245
        %s1252 = scalar_lea.vmem [#allocation2], 24
        %v1253 = vld [vmem:[%s1252] sm:$0xff]
        %v1254 = vmul.f32 %v1024, %v525
        %v1255 = vadd.f32 %v1254, %v1253
        %vm1256 = vcmp.gt.f32.partialorder %v1255, 0.3
        %v1257 = vsel %vm1256, 1, 0
        %v1258 = vcvt.s32.f32 %v1257
        %v1259 = vpack.c.bf16 %v1258, %v1258
        %vm1260 = vcmp.lt.f32.partialorder %v1255, 0.3
        %v1261 = vsel %vm1260, %v1255, 0.0
        %v1262 = vld [vmem:[#allocation11] sm:$0xf]
        %v1263 = vld [vmem:[#allocation11 + $0x4] sm:$0xf]
        %v1264 = vld [vmem:[#allocation11 + $0x8] sm:$0xf]
        %v1265 = vld [vmem:[#allocation11 + $0xc] sm:$0xf]
        %v1266 = vld [vmem:[#allocation11 + $0x10] sm:$0xf]
        %v1267 = vld [vmem:[#allocation11 + $0x14] sm:$0xf]
        %v1268 = vld [vmem:[#allocation11 + $0x18] sm:$0xf]
        %v1269 = vld [vmem:[#allocation11 + $0x1c] sm:$0xf]
        %v1270 = vld [vmem:[#allocation11 + $0x20] sm:$0xf]
        %v1271 = vld [vmem:[#allocation11 + $0x24] sm:$0xf]
        %v1272 = vld [vmem:[#allocation11 + $0x28] sm:$0xf]
        %v1273 = vld [vmem:[#allocation11 + $0x2c] sm:$0xf]
        %v1274 = vld [vmem:[#allocation11 + $0x30] sm:$0xf]
        %v1275 = vld [vmem:[#allocation11 + $0x34] sm:$0xf]
        %v1276 = vld [vmem:[#allocation11 + $0x38] sm:$0xf]
        %v1277 = vld [vmem:[#allocation11 + $0x3c] sm:$0xf]
        %v1294 = vunpack.c.l.b16 %v1262
        %v1295 = vunpack.c.l.b16 %v1263
        %v1296 = vunpack.c.l.b16 %v1264
        %v1297 = vunpack.c.l.b16 %v1265
        %v1298 = vunpack.c.l.b16 %v1266
        %v1299 = vunpack.c.l.b16 %v1267
        %v1300 = vunpack.c.l.b16 %v1268
        %v1301 = vunpack.c.l.b16 %v1269
        %v1302 = vunpack.c.l.b16 %v1270
        %v1303 = vunpack.c.l.b16 %v1271
        %v1304 = vunpack.c.l.b16 %v1272
        %v1305 = vunpack.c.l.b16 %v1273
        %v1306 = vunpack.c.l.b16 %v1274
        %v1307 = vunpack.c.l.b16 %v1275
        %v1308 = vunpack.c.l.b16 %v1276
        %v1309 = vunpack.c.l.b16 %v1277
        %v1310 = vpack.c.b16 %v1295, %v1294
        %v1311 = vpack.c.b16 %v1297, %v1296
        %v1312 = vpack.c.b16 %v1299, %v1298
        %v1313 = vpack.c.b16 %v1301, %v1300
        %v1314 = vpack.c.b16 %v1303, %v1302
        %v1315 = vpack.c.b16 %v1305, %v1304
        %v1316 = vpack.c.b16 %v1307, %v1306
        %v1317 = vpack.c.b16 %v1309, %v1308
        %1326 = vmatprep.subr.bf16.mxu0 0
        %1327 = vmatpush1.bf16.msra.mxu0 %v1310
        %1328 = vmatprep.subr.bf16.mxu0 0
        %1329 = vmatpush1.bf16.msra.mxu0 %v1311
        %1330 = vmatprep.subr.bf16.mxu0 0
        %1331 = vmatpush1.bf16.msra.mxu0 %v1312
        %1332 = vmatprep.subr.bf16.mxu0 0
        %1333 = vmatpush1.bf16.msra.mxu0 %v1313
        %1334 = vmatprep.subr.bf16.mxu0 0
        %1335 = vmatpush1.bf16.msra.mxu0 %v1314
        %1336 = vmatprep.subr.bf16.mxu0 0
        %1337 = vmatpush1.bf16.msra.mxu0 %v1315
        %1338 = vmatprep.subr.bf16.mxu0 0
        %1339 = vmatpush1.bf16.msra.mxu0 %v1316
        %1340 = vmatprep.subr.bf16.mxu0 0
        %1341 = vmatpush1.bf16.msra.mxu0 %v1317
        %1342 = vmatprep.subr.bf16.mxu0 0
        %1343 = vmatpush1.bf16.msra.mxu0 0
        %1344 = vmatprep.subr.bf16.mxu0 0
        %1345 = vmatpush1.bf16.msra.mxu0 0
        %1346 = vmatprep.subr.bf16.mxu0 0
        %1347 = vmatpush1.bf16.msra.mxu0 0
        %1348 = vmatprep.subr.bf16.mxu0 0
        %1349 = vmatpush1.bf16.msra.mxu0 0
        %1350 = vmatprep.subr.bf16.mxu0 0
        %1351 = vmatpush1.bf16.msra.mxu0 0
        %1352 = vmatprep.subr.bf16.mxu0 0
        %1353 = vmatpush1.bf16.msra.mxu0 0
        %1354 = vmatprep.subr.bf16.mxu0 0
        %1355 = vmatpush1.bf16.msra.mxu0 0
        %1356 = vmatprep.subr.bf16.mxu0 0
        %1357 = vmatpush1.bf16.msra.mxu0 0
        %1358 = vmatprep.mubr.bf16.mxu0 0
        %1359 = vmatmul.mubr.bf16.gmra.mrb[0].mxu0 %v1259
        %v1360 = vpop.f32.mrb[0].mxu0
        %v1361 = vadd.f32 0.0, %v1360
        %v1362 = vpop.f32.mrb[0].mxu0
        %v1363 = vpop.f32.mrb[0].mxu0
        %v1364 = vpop.f32.mrb[0].mxu0
        %1365 = vdwg.mxu0
        %v1366 = vmul.f32 %v1136, %v532
        %v1367 = vadd.f32 %v1366, %v1361
        %vm1368 = vcmp.gt.f32.partialorder %v1367, 0.3
        %v1369 = vsel %vm1368, 1, 0
        %v1370 = vcvt.s32.f32 %v1369
        %v1371 = vpack.c.bf16 %v1370, %v1370
        %vm1372 = vcmp.lt.f32.partialorder %v1367, 0.3
        %v1373 = vsel %vm1372, %v1367, 0.0
        %v1374 = vld [vmem:[#allocation12] sm:$0xf]
        %v1375 = vld [vmem:[#allocation12 + $0x4] sm:$0xf]
        %v1376 = vld [vmem:[#allocation12 + $0x8] sm:$0xf]
        %v1377 = vld [vmem:[#allocation12 + $0xc] sm:$0xf]
        %v1378 = vld [vmem:[#allocation12 + $0x10] sm:$0xf]
        %v1379 = vld [vmem:[#allocation12 + $0x14] sm:$0xf]
        %v1380 = vld [vmem:[#allocation12 + $0x18] sm:$0xf]
        %v1381 = vld [vmem:[#allocation12 + $0x1c] sm:$0xf]
        %v1382 = vld [vmem:[#allocation12 + $0x20] sm:$0xf]
        %v1383 = vld [vmem:[#allocation12 + $0x24] sm:$0xf]
        %v1384 = vld [vmem:[#allocation12 + $0x28] sm:$0xf]
        %v1385 = vld [vmem:[#allocation12 + $0x2c] sm:$0xf]
        %v1386 = vld [vmem:[#allocation12 + $0x30] sm:$0xf]
        %v1387 = vld [vmem:[#allocation12 + $0x34] sm:$0xf]
        %v1388 = vld [vmem:[#allocation12 + $0x38] sm:$0xf]
        %v1389 = vld [vmem:[#allocation12 + $0x3c] sm:$0xf]
        %v1406 = vunpack.c.l.b16 %v1374
        %v1407 = vunpack.c.l.b16 %v1375
        %v1408 = vunpack.c.l.b16 %v1376
        %v1409 = vunpack.c.l.b16 %v1377
        %v1410 = vunpack.c.l.b16 %v1378
        %v1411 = vunpack.c.l.b16 %v1379
        %v1412 = vunpack.c.l.b16 %v1380
        %v1413 = vunpack.c.l.b16 %v1381
        %v1414 = vunpack.c.l.b16 %v1382
        %v1415 = vunpack.c.l.b16 %v1383
        %v1416 = vunpack.c.l.b16 %v1384
        %v1417 = vunpack.c.l.b16 %v1385
        %v1418 = vunpack.c.l.b16 %v1386
        %v1419 = vunpack.c.l.b16 %v1387
        %v1420 = vunpack.c.l.b16 %v1388
        %v1421 = vunpack.c.l.b16 %v1389
        %v1422 = vpack.c.b16 %v1407, %v1406
        %v1423 = vpack.c.b16 %v1409, %v1408
        %v1424 = vpack.c.b16 %v1411, %v1410
        %v1425 = vpack.c.b16 %v1413, %v1412
        %v1426 = vpack.c.b16 %v1415, %v1414
        %v1427 = vpack.c.b16 %v1417, %v1416
        %v1428 = vpack.c.b16 %v1419, %v1418
        %v1429 = vpack.c.b16 %v1421, %v1420
        %1438 = vmatprep.subr.bf16.mxu0 0
        %1439 = vmatpush1.bf16.msra.mxu0 %v1422
        %1440 = vmatprep.subr.bf16.mxu0 0
        %1441 = vmatpush1.bf16.msra.mxu0 %v1423
        %1442 = vmatprep.subr.bf16.mxu0 0
        %1443 = vmatpush1.bf16.msra.mxu0 %v1424
        %1444 = vmatprep.subr.bf16.mxu0 0
        %1445 = vmatpush1.bf16.msra.mxu0 %v1425
        %1446 = vmatprep.subr.bf16.mxu0 0
        %1447 = vmatpush1.bf16.msra.mxu0 %v1426
        %1448 = vmatprep.subr.bf16.mxu0 0
        %1449 = vmatpush1.bf16.msra.mxu0 %v1427
        %1450 = vmatprep.subr.bf16.mxu0 0
        %1451 = vmatpush1.bf16.msra.mxu0 %v1428
        %1452 = vmatprep.subr.bf16.mxu0 0
        %1453 = vmatpush1.bf16.msra.mxu0 %v1429
        %1454 = vmatprep.subr.bf16.mxu0 0
        %1455 = vmatpush1.bf16.msra.mxu0 0
        %1456 = vmatprep.subr.bf16.mxu0 0
        %1457 = vmatpush1.bf16.msra.mxu0 0
        %1458 = vmatprep.subr.bf16.mxu0 0
        %1459 = vmatpush1.bf16.msra.mxu0 0
        %1460 = vmatprep.subr.bf16.mxu0 0
        %1461 = vmatpush1.bf16.msra.mxu0 0
        %1462 = vmatprep.subr.bf16.mxu0 0
        %1463 = vmatpush1.bf16.msra.mxu0 0
        %1464 = vmatprep.subr.bf16.mxu0 0
        %1465 = vmatpush1.bf16.msra.mxu0 0
        %1466 = vmatprep.subr.bf16.mxu0 0
        %1467 = vmatpush1.bf16.msra.mxu0 0
        %1468 = vmatprep.subr.bf16.mxu0 0
        %1469 = vmatpush1.bf16.msra.mxu0 0
        %1470 = vmatprep.mubr.bf16.mxu0 0
        %1471 = vmatmul.mubr.bf16.gmra.mrb[0].mxu0 %v1371
        %v1472 = vpop.f32.mrb[0].mxu0
        %v1473 = vadd.f32 0.0, %v1472
        %v1474 = vpop.f32.mrb[0].mxu0
        %v1475 = vpop.f32.mrb[0].mxu0
        %v1476 = vpop.f32.mrb[0].mxu0
        %1477 = vdwg.mxu0
        %v1478 = vmul.f32 %v1247, %v539
        %v1479 = vadd.f32 %v1478, %v1473
        %vm1480 = vcmp.gt.f32.partialorder %v1479, 1000000.0
        %v1481 = vsel %vm1480, 1, 0
        %v1482 = vcvt.s32.f32 %v1481
        %vm1483 = vcmp.lt.f32.partialorder %v1479, 1000000.0
        %v1484 = vsel %vm1483, %v1479, 0.0
        %s1485 = scalar_lea.vmem %s427, 24 [#allocation18]
        %1486 = vst [vmem:[%s1485] sm:$0xff] %v1484
        %s1487 = scalar_lea.vmem %s434, 24 [#allocation19]
        %1488 = vst [vmem:[%s1487] sm:$0xff] %v1482
        %1489 = vst [vmem:[#allocation3] sm:$0xff] %v1261
        %1490 = vst [vmem:[#allocation4] sm:$0xff] %v1373
        %1491 = vst [vmem:[#allocation5] sm:$0xff] %v1484
        %s1492 = sand.u32 %s208, 1
        %s1493 = scalar_lea.sflag [#allocation8], %s1492
        %s1494 = sand.u32 %s208, 1
        %s1495 = smul.addr %s1494, 32
        %s1496 = scalar_lea.vmem [#allocation18], %s1495
        %s1497 = sand.u32 %s236, 1
        %s1498 = scalar_lea.sflag [#allocation20], %s1497
        %s1499 = sand.u32 %s236, 1
        %s1500 = smul.addr %s1499, 32
        %s1501 = scalar_lea.vmem [#allocation19], %s1500
        // Predicated region
        $region81: #{tpu_custom_call.1} parent=47 // pred_check
          %p1502 = pneg %p218
        $region82: #{tpu_custom_call.1} parent=47 // pred_check_branch
          %1504 = sbr.rel (%p1502) target = $region84
        $region83: #{tpu_custom_call.1} parent=47 // pred_region
          %s1505 = smul.u32 4, %s37
          %s1507 = ssub.s32 512, 512
          %1508 = vsyncadd %s1493, %s1507
          %s1509 = sadd.s32 %s36, %s1505
          %s1510 = smul.addr %s1509, 128
          %s1511 = scalar_lea.hbm %s7, %s1510
          %s1512 = sshll.u32 %s1496, 4
          %s1513 = int_to_ptr.vmem [resolvable:$true] %s1512
          %1518 = dma.vmem_to_hbm [thread:$0]  %s1513, 512, %s1511, %s1493, 128, 128, 8
        $region84: #{tpu_custom_call.1} parent=47 // pred_fallthru
          _
        // Predicated region
        $region85: #{tpu_custom_call.1} parent=47 // pred_check
          %p1519 = pneg %p246
        $region86: #{tpu_custom_call.1} parent=47 // pred_check_branch
          %1521 = sbr.rel (%p1519) target = $region88
        $region87: #{tpu_custom_call.1} parent=47 // pred_region
          %s1522 = smul.u32 4, %s37
          %s1524 = ssub.s32 512, 512
          %1525 = vsyncadd %s1498, %s1524
          %s1526 = sadd.s32 %s36, %s1522
          %s1527 = smul.addr %s1526, 128
          %s1528 = scalar_lea.hbm %s8, %s1527
          %s1529 = sshll.u32 %s1501, 4
          %s1530 = int_to_ptr.vmem [resolvable:$true] %s1529
          %1535 = dma.vmem_to_hbm [thread:$0]  %s1530, 512, %s1528, %s1498, 128, 128, 8
        $region88: #{tpu_custom_call.1} parent=47 // pred_fallthru
          _
      $region48: #{tpu_custom_call.1} parent=5 // pred_fallthru
        _
      %p1536 = scmp.le.s32.totalorder 2, %s27
      // Predicated region
      $region89: #{tpu_custom_call.1} parent=5 // pred_check
        %p1537 = pneg %p1536
      $region90: #{tpu_custom_call.1} parent=5 // pred_check_branch
        %1539 = sbr.rel (%p1537) target = $region92
      $region91: #{tpu_custom_call.1} parent=5 // pred_region
        %s1540 = ssub.s32 %s27, 2
        // Predicated region
        $region93: #{tpu_custom_call.1} parent=91 // pred_check
          %p1541 = pneg %p224
        $region94: #{tpu_custom_call.1} parent=91 // pred_check_branch
          %1543 = sbr.rel (%p1541) target = $region96
        $region95: #{tpu_custom_call.1} parent=91 // pred_region
          %s1544 = sand.u32 %s209, 1
          %s1545 = scalar_lea.sflag [#allocation8], %s1544
          %s1546 = sand.u32 %s209, 1
          %s1547 = smul.addr %s1546, 32
          %s1548 = scalar_lea.vmem [#allocation18], %s1547
          %1549 = dma.done %s1545, 512
        $region96: #{tpu_custom_call.1} parent=91 // pred_fallthru
          _
        // Predicated region
        $region97: #{tpu_custom_call.1} parent=91 // pred_check
          %p1550 = pneg %p252
        $region98: #{tpu_custom_call.1} parent=91 // pred_check_branch
          %1552 = sbr.rel (%p1550) target = $region100
        $region99: #{tpu_custom_call.1} parent=91 // pred_region
          %s1553 = sand.u32 %s237, 1
          %s1554 = scalar_lea.sflag [#allocation20], %s1553
          %s1555 = sand.u32 %s237, 1
          %s1556 = smul.addr %s1555, 32
          %s1557 = scalar_lea.vmem [#allocation19], %s1556
          %1558 = dma.done %s1554, 512
        $region100: #{tpu_custom_call.1} parent=91 // pred_fallthru
          _
      $region92: #{tpu_custom_call.1} parent=5 // pred_fallthru
        _
    $region6: #{tpu_custom_call.1} parent=1 // loop_footer
      %s31 = sadd.s32 1, %s27
    $region7: #{tpu_custom_call.1} parent=1 // loop_footer_branch
      %26 = sbr.rel target = $region3
    $region8: #{tpu_custom_call.1} parent=1 // loop_exit
      _
    %1559 = vsyncpa [#allocation7], 1
    %s1560 = scalar_lea.sflag [#allocation7], 1
    %1561 = vsyncpa %s1560, 1
    %1562 = vsyncpa [#allocation10], 1
    %1563 = vsyncpa [#allocation13], 1
    %1564 = vsyncpa [#allocation16], 1
    %1565 = vsyncpa [#allocation8], 1
    %s1566 = scalar_lea.sflag [#allocation8], 1
    %1567 = vsyncpa %s1566, 1
    %1568 = vsyncpa [#allocation20], 1
    %s1569 = scalar_lea.sflag [#allocation20], 1
    %1570 = vsyncpa %s1569, 1

</llo_original>
